<compile_context>
chip_gen: v5e
topology: v5e:2x2
jax: 0.10.0
libtpu: 0.0.40
codegen_flags: <defaults>
</compile_context>

<pallas_src>
import functools

import numpy as np
import jax
import jax.numpy as jnp
from jax import lax
from jax.experimental import pallas as pl
from jax.experimental.pallas import tpu as pltpu


def _round_up(x, m):
    return (x + m - 1) // m * m


def _batch_axis_semantics():
    """CORE_PARALLEL on multi-TensorCore chips (v7x); plain PARALLEL elsewhere."""
    try:
        if "v7" in jax.devices()[0].device_kind.lower():
            return pltpu.CORE_PARALLEL
    except Exception:
        pass
    return pltpu.PARALLEL


def _backbone_kernel(x_ref, w1, b1, w2, b2, w3, b3, out_ref, *, n_valid):
    """Grid = (batch, point_tile).  out_ref: (8, 1024) f32 running partial max."""
    tile_n = x_ref.shape[0]
    t = pl.program_id(1)

    @pl.when(t == 0)
    def _init():
        out_ref[...] = jnp.full(out_ref.shape, -jnp.inf, out_ref.dtype)

    def layer(h, w_r, b_r):
        # bf16 MXU matmul, f32 accumulate; bias + ReLU in f32 on the VPU.
        y = jnp.dot(h.astype(jnp.bfloat16), w_r[...],
                    preferred_element_type=jnp.float32) + b_r[...]
        return jnp.maximum(y, 0.0)

    h = layer(x_ref[...], w1, b1)          # (tile_n, 64)
    h = layer(h, w2, b2)                   # (tile_n, 128)
    h = layer(h, w3, b3)                   # (tile_n, 1024)

    # Mask zero-padded points to -inf so they can never win the max-pool.
    # (Only traced when padding actually exists; n_valid/tile_n are static.)
    if n_valid % tile_n != 0:
        row = lax.broadcasted_iota(jnp.int32, (tile_n, 1), 0) + t * tile_n
        h = jnp.where(row < n_valid, h, -jnp.inf)

    # Partial max as pure VPU elementwise maxes between 8-sublane slabs; the
    # final 8->1 cross-sublane reduce is deferred to the head (once per batch).
    part = jnp.max(h.reshape(tile_n // 8, 8, h.shape[-1]), axis=0)   # (8, 1024)
    out_ref[...] = jnp.maximum(out_ref[...], part)


def _head_kernel(g_ref, f1w, f1b, f2w, f2b, f3w, f3b, out_ref):
    """Batched FC head: (B, 8, 1024) partial maxes -> (B, 9) transform params."""
    g = jnp.max(g_ref[...], axis=1)                       # (B, 1024) final pool

    def layer(h, w_r, b_r, relu=True):
        y = jnp.dot(h.astype(jnp.bfloat16), w_r[...],
                    preferred_element_type=jnp.float32) + b_r[...]
        return jnp.maximum(y, 0.0) if relu else y

    z = layer(g, f1w, f1b)                                # (B, 512)
    z = layer(z, f2w, f2b)                                # (B, 256)
    z = layer(z, f3w, f3b, relu=False)                    # (B, 9)
    # + identity: 1.0 at flat positions 0, 4, 8 (eye(3) flattened).
    lane = lax.broadcasted_iota(jnp.int32, z.shape, 1)
    out_ref[...] = z + jnp.where(lane % 4 == 0, 1.0, 0.0)


def stn3d_forward(x, params, *, tile_n=512):
    """x: (B, 3, N) float32.  Returns (B, 3, 3) float32 (PyTorch STN3d.forward)."""
    B, C, N = x.shape
    assert C == 3, C

    tile_n = min(_round_up(tile_n, 8), _round_up(N, 8))
    n_pad = _round_up(N, tile_n)

    # Points on sublanes, channels on lanes; keep the raw coordinates in f32.
    x_pts = jnp.swapaxes(x, 1, 2)                          # (B, N, 3) f32
    if n_pad != N:
        x_pts = jnp.pad(x_pts, ((0, 0), (0, n_pad - N), (0, 0)))

    def w(name):
        return params[name].astype(jnp.bfloat16)

    def b(name):
        return params[name].astype(jnp.float32).reshape(1, -1)

    def const_spec(a):
        # Full-array block, same block every grid step -> DMA'd once, reused.
        return pl.BlockSpec(a.shape, lambda bb, tt, _nd=a.ndim: (0,) * _nd)

    # ---- Backbone: conv1/2/3 + global max-pool (partial, 8 sublane rows). ----
    bb_operands = (x_pts, w("w1"), b("b1"), w("w2"), b("b2"), w("w3"), b("b3"))
    in_specs = [pl.BlockSpec((None, tile_n, 3), lambda bb, tt: (bb, tt, 0))]
    in_specs += [const_spec(a) for a in bb_operands[1:]]

    pooled8 = pl.pallas_call(
        functools.partial(_backbone_kernel, n_valid=N),
        out_shape=jax.ShapeDtypeStruct((B, 8, 1024), jnp.float32),
        grid_spec=pltpu.PrefetchScalarGridSpec(
            num_scalar_prefetch=0,
            grid=(B, n_pad // tile_n),
            in_specs=in_specs,
            # Output block index depends only on the batch axis and the
            # reduction axis is last -> block stays VMEM-resident and acts as
            # the max accumulator across point tiles.
            out_specs=pl.BlockSpec((None, 8, 1024), lambda bb, tt: (bb, 0, 0)),
        ),
        compiler_params=pltpu.CompilerParams(
            dimension_semantics=(_batch_axis_semantics(), pltpu.ARBITRARY),
            vmem_limit_bytes=32 * 1024 * 1024),
    )(*bb_operands)

    # ---- FC head, batched over all B rows in one small Pallas call. ----
    head_operands = (pooled8, w("f1w"), b("f1b"), w("f2w"), b("f2b"),
                     w("f3w"), b("f3b"))
    out = pl.pallas_call(
        _head_kernel,
        out_shape=jax.ShapeDtypeStruct((B, 9), jnp.float32),
    )(*head_operands)

    return out.reshape(B, 3, 3)


def make_params(key):
    """PyTorch-default-style init (uniform +/- 1/sqrt(fan_in)), weights stored (Cin, Cout)."""
    layers = [("w1", "b1", 3, 64), ("w2", "b2", 64, 128), ("w3", "b3", 128, 1024),
              ("f1w", "f1b", 1024, 512), ("f2w", "f2b", 512, 256), ("f3w", "f3b", 256, 9)]
    p = {}
    keys = jax.random.split(key, 2 * len(layers))
    for i, (wn, bn, cin, cout) in enumerate(layers):
        bound = 1.0 / np.sqrt(cin)
        p[wn] = jax.random.uniform(keys[2 * i], (cin, cout), jnp.float32, -bound, bound)
        p[bn] = jax.random.uniform(keys[2 * i + 1], (cout,), jnp.float32, -bound, bound)
    return p


def reference_forward(x, params):
    """Pure-JAX f32 re-implementation of STN3d.forward (channels-first, like PyTorch)."""
    def conv(h, wn, bn):
        return jnp.einsum('bcn,cd->bdn', h, params[wn]) + params[bn][None, :, None]

    h = jax.nn.relu(conv(x, "w1", "b1"))
    h = jax.nn.relu(conv(h, "w2", "b2"))
    h = jax.nn.relu(conv(h, "w3", "b3"))          # (B, 1024, N)
    g = jnp.max(h, axis=2)                        # (B, 1024)  == torch.max(x, 2)
    z = jax.nn.relu(g @ params["f1w"] + params["f1b"])
    z = jax.nn.relu(z @ params["f2w"] + params["f2b"])
    z = z @ params["f3w"] + params["f3b"]         # (B, 9)
    z = z + jnp.eye(3, dtype=jnp.float32).reshape(1, 9)
    return z.reshape(-1, 3, 3)


if __name__ == "__main__":
    # Small demo shapes: N=500 with tile_n=256 exercises multi-tile streaming,
    # the cross-tile max accumulator, and the -inf masking of padded points.
    B, N = 2, 500
    key = jax.random.PRNGKey(0)
    kx, kp = jax.random.split(key)
    x = jax.random.normal(kx, (B, 3, N), dtype=jnp.float32)
    params = make_params(kp)

    out = jax.block_until_ready(stn3d_forward(x, params, tile_n=256))
    ref = reference_forward(x, params)

    assert out.shape == (B, 3, 3), out.shape
    # Kernel does bf16-operand / f32-accumulate matmuls; reference is pure f32.
    np.testing.assert_allclose(np.asarray(out), np.asarray(ref), rtol=5e-2, atol=5e-2)
    print("KERNEL_OK")
</pallas_src>

<mosaic_0001>
module attributes {stable_mosaic.version = 11 : i64} {
  func.func @_backbone_kernel(%arg0: i32, %arg1: i32, %arg2: memref<1x256x3xf32, #tpu.memory_space<vmem>>, %arg3: memref<3x64xbf16, #tpu.memory_space<vmem>>, %arg4: memref<1x64xf32, #tpu.memory_space<vmem>>, %arg5: memref<64x128xbf16, #tpu.memory_space<vmem>>, %arg6: memref<1x128xf32, #tpu.memory_space<vmem>>, %arg7: memref<128x1024xbf16, #tpu.memory_space<vmem>>, %arg8: memref<1x1024xf32, #tpu.memory_space<vmem>>, %arg9: memref<1x8x1024xf32, #tpu.memory_space<vmem>>) attributes {dimension_semantics = [#tpu.dimension_semantics<parallel>, #tpu.dimension_semantics<arbitrary>], iteration_bounds = array<i64: 2, 2>, scalar_prefetch = 0 : i64, scratch_operands = 0 : i64, tpu.core_type = #tpu.core_type<tc>, window_params = [{transform_indices = @transform_0, window_bounds = array<i64: 1, 256, 3>}, {pipeline_mode = #tpu.pipeline_mode<synchronous>, transform_indices = @transform_1, window_bounds = array<i64: 3, 64>}, {pipeline_mode = #tpu.pipeline_mode<synchronous>, transform_indices = @transform_2, window_bounds = array<i64: 1, 64>}, {pipeline_mode = #tpu.pipeline_mode<synchronous>, transform_indices = @transform_3, window_bounds = array<i64: 64, 128>}, {pipeline_mode = #tpu.pipeline_mode<synchronous>, transform_indices = @transform_4, window_bounds = array<i64: 1, 128>}, {pipeline_mode = #tpu.pipeline_mode<synchronous>, transform_indices = @transform_5, window_bounds = array<i64: 128, 1024>}, {pipeline_mode = #tpu.pipeline_mode<synchronous>, transform_indices = @transform_6, window_bounds = array<i64: 1, 1024>}, {transform_indices = @transform_7, window_bounds = array<i64: 1, 8, 1024>}]} {
    %c0_i32 = arith.constant 0 : i32
    %0 = arith.cmpi eq, %arg1, %c0_i32 : i32
    %1 = arith.extui %0 : i1 to i32
    %c0_i32_0 = arith.constant 0 : i32
    %2 = arith.cmpi ne, %1, %c0_i32_0 : i32
    scf.if %2 {
      %cst_28 = arith.constant 0xFF800000 : f32
      %47 = vector.broadcast %cst_28 : f32 to vector<8x1024xf32>
      %c0_29 = arith.constant 0 : index
      %c0_30 = arith.constant 0 : index
      %c0_31 = arith.constant 0 : index
      %48 = vector.load %arg9[%c0_29, %c0_30, %c0_31] : memref<1x8x1024xf32, #tpu.memory_space<vmem>>, vector<1x8x1024xf32>
      %49 = vector.shape_cast %48 : vector<1x8x1024xf32> to vector<8x1024xf32>
      %50 = vector.shape_cast %47 : vector<8x1024xf32> to vector<1x8x1024xf32>
      tpu.vector_store %arg9[%c0_29, %c0_30, %c0_31], %50 {strides = array<i32>} : memref<1x8x1024xf32, #tpu.memory_space<vmem>>, vector<1x8x1024xf32>,
    } else {
    }
    %c0 = arith.constant 0 : index
    %c0_1 = arith.constant 0 : index
    %c0_2 = arith.constant 0 : index
    %3 = vector.load %arg2[%c0, %c0_1, %c0_2] : memref<1x256x3xf32, #tpu.memory_space<vmem>>, vector<1x256x3xf32>
    %4 = vector.shape_cast %3 : vector<1x256x3xf32> to vector<256x3xf32>
    %5 = arith.truncf %4 : vector<256x3xf32> to vector<256x3xbf16>
    %c0_3 = arith.constant 0 : index
    %c0_4 = arith.constant 0 : index
    %6 = vector.load %arg3[%c0_3, %c0_4] : memref<3x64xbf16, #tpu.memory_space<vmem>>, vector<3x64xbf16>
    %cst = arith.constant dense<0.000000e+00> : vector<256x64xf32>
    %7 = tpu.matmul %5, %6, %cst {dimension_numbers = #tpu.dot_dimension_numbers<[1], [0], [0], [1], [0, 0, 1, 1], [], []>} : vector<256x3xbf16>, vector<3x64xbf16>, vector<256x64xf32> -> vector<256x64xf32>
    %c0_5 = arith.constant 0 : index
    %c0_6 = arith.constant 0 : index
    %8 = vector.load %arg4[%c0_5, %c0_6] : memref<1x64xf32, #tpu.memory_space<vmem>>, vector<1x64xf32>
    %9 = vector.broadcast %8 : vector<1x64xf32> to vector<256x64xf32>
    %10 = arith.addf %7, %9 : vector<256x64xf32>
    %cst_7 = arith.constant 0.000000e+00 : f32
    %11 = vector.broadcast %cst_7 : f32 to vector<256x64xf32>
    %12 = arith.maximumf %10, %11 : vector<256x64xf32>
    %13 = arith.truncf %12 : vector<256x64xf32> to vector<256x64xbf16>
    %c0_8 = arith.constant 0 : index
    %c0_9 = arith.constant 0 : index
    %14 = vector.load %arg5[%c0_8, %c0_9] : memref<64x128xbf16, #tpu.memory_space<vmem>>, vector<64x128xbf16>
    %cst_10 = arith.constant dense<0.000000e+00> : vector<256x128xf32>
    %15 = tpu.matmul %13, %14, %cst_10 {dimension_numbers = #tpu.dot_dimension_numbers<[1], [0], [0], [1], [0, 0, 1, 1], [], []>} : vector<256x64xbf16>, vector<64x128xbf16>, vector<256x128xf32> -> vector<256x128xf32>
    %c0_11 = arith.constant 0 : index
    %c0_12 = arith.constant 0 : index
    %16 = vector.load %arg6[%c0_11, %c0_12] : memref<1x128xf32, #tpu.memory_space<vmem>>, vector<1x128xf32>
    %17 = vector.broadcast %16 : vector<1x128xf32> to vector<256x128xf32>
    %18 = arith.addf %15, %17 : vector<256x128xf32>
    %cst_13 = arith.constant 0.000000e+00 : f32
    %19 = vector.broadcast %cst_13 : f32 to vector<256x128xf32>
    %20 = arith.maximumf %18, %19 : vector<256x128xf32>
    %21 = arith.truncf %20 : vector<256x128xf32> to vector<256x128xbf16>
    %c0_14 = arith.constant 0 : index
    %c0_15 = arith.constant 0 : index
    %22 = vector.load %arg7[%c0_14, %c0_15] : memref<128x1024xbf16, #tpu.memory_space<vmem>>, vector<128x1024xbf16>
    %cst_16 = arith.constant dense<0.000000e+00> : vector<256x1024xf32>
    %23 = tpu.matmul %21, %22, %cst_16 {dimension_numbers = #tpu.dot_dimension_numbers<[1], [0], [0], [1], [0, 0, 1, 1], [], []>} : vector<256x128xbf16>, vector<128x1024xbf16>, vector<256x1024xf32> -> vector<256x1024xf32>
    %c0_17 = arith.constant 0 : index
    %c0_18 = arith.constant 0 : index
    %24 = vector.load %arg8[%c0_17, %c0_18] : memref<1x1024xf32, #tpu.memory_space<vmem>>, vector<1x1024xf32>
    %25 = vector.broadcast %24 : vector<1x1024xf32> to vector<256x1024xf32>
    %26 = arith.addf %23, %25 : vector<256x1024xf32>
    %cst_19 = arith.constant 0.000000e+00 : f32
    %27 = vector.broadcast %cst_19 : f32 to vector<256x1024xf32>
    %28 = arith.maximumf %26, %27 : vector<256x1024xf32>
    %29 = tpu.iota {dimensions = array<i32: 0>} : vector<256x1xi32>
    %c256_i32 = arith.constant 256 : i32
    %30 = arith.muli %arg1, %c256_i32 : i32
    %31 = vector.broadcast %30 : i32 to vector<256x1xi32>
    %32 = arith.addi %29, %31 : vector<256x1xi32>
    %c500_i32 = arith.constant 500 : i32
    %33 = vector.broadcast %c500_i32 : i32 to vector<256x1xi32>
    %34 = arith.cmpi slt, %32, %33 : vector<256x1xi32>
    %cst_20 = arith.constant 0xFF800000 : f32
    %35 = vector.shape_cast %34 : vector<256x1xi1> to vector<256x1xi1>
    %36 = vector.broadcast %35 : vector<256x1xi1> to vector<256x1024xi1>
    %37 = vector.broadcast %cst_20 : f32 to vector<256x1024xf32>
    %38 = arith.select %36, %28, %37 : vector<256x1024xi1>, vector<256x1024xf32>
    %39 = vector.shape_cast %38 : vector<256x1024xf32> to vector<32x8x1024xf32>
    %cst_21 = arith.constant dense<0xFF800000> : vector<8x1024xf32>
    %40 = vector.multi_reduction <maximumf>, %39, %cst_21 [0] : vector<32x8x1024xf32> to vector<8x1024xf32>
    %c0_22 = arith.constant 0 : index
    %c0_23 = arith.constant 0 : index
    %c0_24 = arith.constant 0 : index
    %41 = vector.load %arg9[%c0_22, %c0_23, %c0_24] : memref<1x8x1024xf32, #tpu.memory_space<vmem>>, vector<1x8x1024xf32>
    %42 = vector.shape_cast %41 : vector<1x8x1024xf32> to vector<8x1024xf32>
    %43 = arith.maximumf %42, %40 : vector<8x1024xf32>
    %c0_25 = arith.constant 0 : index
    %c0_26 = arith.constant 0 : index
    %c0_27 = arith.constant 0 : index
    %44 = vector.load %arg9[%c0_25, %c0_26, %c0_27] : memref<1x8x1024xf32, #tpu.memory_space<vmem>>, vector<1x8x1024xf32>
    %45 = vector.shape_cast %44 : vector<1x8x1024xf32> to vector<8x1024xf32>
    %46 = vector.shape_cast %43 : vector<8x1024xf32> to vector<1x8x1024xf32>
    tpu.vector_store %arg9[%c0_25, %c0_26, %c0_27], %46 {strides = array<i32>} : memref<1x8x1024xf32, #tpu.memory_space<vmem>>, vector<1x8x1024xf32>,
    return
  }
  func.func @transform_0(%arg0: i32, %arg1: i32) -> (i32, i32, i32) {
    %c0_i32 = arith.constant 0 : i32
    %c0_i32_0 = arith.constant 0 : i32
    return %arg0, %arg1, %c0_i32 : i32, i32, i32
  }
  func.func @transform_1(%arg0: i32, %arg1: i32) -> (i32, i32) {
    %c0_i32 = arith.constant 0 : i32
    %c0_i32_0 = arith.constant 0 : i32
    %c0_i32_1 = arith.constant 0 : i32
    return %c0_i32, %c0_i32_0 : i32, i32
  }
  func.func @transform_2(%arg0: i32, %arg1: i32) -> (i32, i32) {
    %c0_i32 = arith.constant 0 : i32
    %c0_i32_0 = arith.constant 0 : i32
    %c0_i32_1 = arith.constant 0 : i32
    return %c0_i32, %c0_i32_0 : i32, i32
  }
  func.func @transform_3(%arg0: i32, %arg1: i32) -> (i32, i32) {
    %c0_i32 = arith.constant 0 : i32
    %c0_i32_0 = arith.constant 0 : i32
    %c0_i32_1 = arith.constant 0 : i32
    return %c0_i32, %c0_i32_0 : i32, i32
  }
  func.func @transform_4(%arg0: i32, %arg1: i32) -> (i32, i32) {
    %c0_i32 = arith.constant 0 : i32
    %c0_i32_0 = arith.constant 0 : i32
    %c0_i32_1 = arith.constant 0 : i32
    return %c0_i32, %c0_i32_0 : i32, i32
  }
  func.func @transform_5(%arg0: i32, %arg1: i32) -> (i32, i32) {
    %c0_i32 = arith.constant 0 : i32
    %c0_i32_0 = arith.constant 0 : i32
    %c0_i32_1 = arith.constant 0 : i32
    return %c0_i32, %c0_i32_0 : i32, i32
  }
  func.func @transform_6(%arg0: i32, %arg1: i32) -> (i32, i32) {
    %c0_i32 = arith.constant 0 : i32
    %c0_i32_0 = arith.constant 0 : i32
    %c0_i32_1 = arith.constant 0 : i32
    return %c0_i32, %c0_i32_0 : i32, i32
  }
  func.func @transform_7(%arg0: i32, %arg1: i32) -> (i32, i32, i32) {
    %c0_i32 = arith.constant 0 : i32
    %c0_i32_0 = arith.constant 0 : i32
    %c0_i32_1 = arith.constant 0 : i32
    return %arg0, %c0_i32, %c0_i32_0 : i32, i32, i32
  }
}

</mosaic_0001>

<llo_original>
// kernel: tpu_custom_call.1
$region0: #{tpu_custom_call.1}
  #allocation0 [shape = 'u32[]', space=smem, size = 0x4, offset = 0x4, fixed_abs, tag = 'smem constant byte address 0x4 - core index']
  #allocation1 [shape = 'u32[72,128]{1,0:T(1,128)}', space=vmem, size = 0x9000, scoped, tag = 'internal scratch']
  %s0 = inlined_call_operand.vmem [shape: f32[2,512,3], index: 0, kind: input, shape index: {}]
  %s1 = inlined_call_operand.vmem [shape: bf16[3,64], index: 1, kind: input, shape index: {}]
  %s2 = inlined_call_operand.vmem [shape: f32[1,64], index: 2, kind: input, shape index: {}]
  %s3 = inlined_call_operand.vmem [shape: bf16[64,128], index: 3, kind: input, shape index: {}]
  %s4 = inlined_call_operand.vmem [shape: f32[1,128], index: 4, kind: input, shape index: {}]
  %s5 = inlined_call_operand.vmem [shape: bf16[128,1024], index: 5, kind: input, shape index: {}]
  %s6 = inlined_call_operand.vmem [shape: f32[1,1024], index: 6, kind: input, shape index: {}]
  %s7 = inlined_call_operand.hbm [shape: f32[2,8,1024], index: 7, kind: output, shape index: {}]
  %s8 = sld [smem:[#allocation0]]
  $region65: #{tpu_custom_call.1} parent=0
    _
  %s10 = ssub.s32 1, %s8
  %s11 = scalar_select 0, %s10, %s8
  $region1: #{tpu_custom_call.1} parent=0
    #allocation2 [shape = 'u8[65536]{0}', space=vmem, size = 0x10000, scoped, tag = 'output window, operand 0']
    #allocation3 [shape = 's32[2]{0}', space=sflag, size = 0x8, scoped, tag = 'scoped memory for tpu_custom_call.1']
    %12 = vsyncpa [#allocation3], 0
    %s13 = scalar_lea.sflag [#allocation3], 1
    %14 = vsyncpa %s13, 0
    loop: start=0, step=1, limit=6
    $region2: #{tpu_custom_call.1} parent=1 // loop_pre_header
      _
    $region3: #{tpu_custom_call.1} parent=1 // loop_header
      %s16 = sphi 0, %s20
      %p17 = scmp.ge.s32.totalorder %s16, 6
      %s23 = sphi 0, %s35
      %s24 = sphi 0, %s31
      %s25 = sphi 0, %s23
      %s26 = sphi 0, %s24
      %s27 = sphi 0, %s25
      %s28 = sphi 0, %s26
      %s40 = sphi 0, %s42
      %s43 = sphi 0, %s40
      %s44 = sphi 0, %s43
      %s60 = sphi 0, %s44
      %s64 = sphi 0, %s64
      %s66 = sphi 0, %s64
      %s67 = sphi 0, %s66
      %s81 = sphi 0, %s67
      %s85 = sphi 0, %s85
      %s87 = sphi 0, %s85
      %s88 = sphi 0, %s87
      %s102 = sphi 0, %s88
      %s106 = sphi 0, %s106
      %s108 = sphi 0, %s106
      %s109 = sphi 0, %s108
      %s123 = sphi 0, %s109
      %s127 = sphi 0, %s127
      %s129 = sphi 0, %s127
      %s130 = sphi 0, %s129
      %s144 = sphi 0, %s130
      %s148 = sphi 0, %s148
      %s150 = sphi 0, %s148
      %s151 = sphi 0, %s150
      %s165 = sphi 0, %s151
      %s169 = sphi 0, %s169
      %s171 = sphi 0, %s169
      %s172 = sphi 0, %s171
      %s186 = sphi 0, %s172
      %s192 = sphi 0, %s194
      %s195 = sphi 0, %s192
      %s196 = sphi 0, %s195
      %s212 = sphi 0, %s196
    $region4: #{tpu_custom_call.1} parent=1 // loop_header_branch
      %19 = sbr.rel (%p17) target = $region8
    $region5: #{tpu_custom_call.1} parent=1 // loop_body
      %s21 = ssub.s32 %s16, 1
      %s22 = ssub.s32 %s16, 2
      %s29 = sadd.s32 1, %s24
      %p30 = scmp.ge.s32.totalorder %s29, 2
      %s31 = scalar_select %p30, 0, %s29
      %s32 = sadd.s32 1, %s23
      %s33 = scalar_select %p30, %s32, %s23
      %p34 = scmp.ge.s32.totalorder %s33, 2
      %s35 = scalar_select %p34, 0, %s33
      %s36 = ssub.s32 %s23, %s35
      %s37 = ssub.s32 %s24, %s31
      %s38 = sor.u32 %s36, %s37
      %p39 = scmp.eq.s32.totalorder %s38, 0
      %s41 = sadd.s32 %s40, 1
      %s42 = scalar_select %p39, %s40, %s41
      %p45 = pneg %p39
      %p46 = scmp.eq.s32.totalorder %s16, 3
      %p47 = por %p45, %p46
      %p48 = scmp.ne.s32.totalorder %s40, %s43
      %p49 = scmp.eq.s32.totalorder %s16, 0
      %p50 = por %p48, %p49
      %p51 = scmp.ne.s32.totalorder %s40, %s43
      %p52 = scmp.eq.s32.totalorder %s21, 3
      %p53 = por %p51, %p52
      %p54 = scmp.ne.s32.totalorder %s43, %s44
      %p55 = scmp.eq.s32.totalorder %s21, 0
      %p56 = por %p54, %p55
      %p57 = scmp.ne.s32.totalorder %s43, %s44
      %p58 = scmp.eq.s32.totalorder %s22, 3
      %p59 = por %p57, %p58
      %p61 = scmp.ne.s32.totalorder %s44, %s60
      %p62 = scmp.eq.s32.totalorder %s22, 0
      %p63 = por %p61, %p62
      %s65 = sadd.s32 %s64, 1
      %p68 = scmp.eq.s32.totalorder %s16, 3
      %p69 = scmp.ne.s32.totalorder %s64, %s66
      %p70 = scmp.eq.s32.totalorder %s16, 0
      %p71 = por %p69, %p70
      %p72 = scmp.ne.s32.totalorder %s64, %s66
      %p73 = scmp.eq.s32.totalorder %s21, 3
      %p74 = por %p72, %p73
      %p75 = scmp.ne.s32.totalorder %s66, %s67
      %p76 = scmp.eq.s32.totalorder %s21, 0
      %p77 = por %p75, %p76
      %p78 = scmp.ne.s32.totalorder %s66, %s67
      %p79 = scmp.eq.s32.totalorder %s22, 3
      %p80 = por %p78, %p79
      %p82 = scmp.ne.s32.totalorder %s67, %s81
      %p83 = scmp.eq.s32.totalorder %s22, 0
      %p84 = por %p82, %p83
      %s86 = sadd.s32 %s85, 1
      %p89 = scmp.eq.s32.totalorder %s16, 3
      %p90 = scmp.ne.s32.totalorder %s85, %s87
      %p91 = scmp.eq.s32.totalorder %s16, 0
      %p92 = por %p90, %p91
      %p93 = scmp.ne.s32.totalorder %s85, %s87
      %p94 = scmp.eq.s32.totalorder %s21, 3
      %p95 = por %p93, %p94
      %p96 = scmp.ne.s32.totalorder %s87, %s88
      %p97 = scmp.eq.s32.totalorder %s21, 0
      %p98 = por %p96, %p97
      %p99 = scmp.ne.s32.totalorder %s87, %s88
      %p100 = scmp.eq.s32.totalorder %s22, 3
      %p101 = por %p99, %p100
      %p103 = scmp.ne.s32.totalorder %s88, %s102
      %p104 = scmp.eq.s32.totalorder %s22, 0
      %p105 = por %p103, %p104
      %s107 = sadd.s32 %s106, 1
      %p110 = scmp.eq.s32.totalorder %s16, 3
      %p111 = scmp.ne.s32.totalorder %s106, %s108
      %p112 = scmp.eq.s32.totalorder %s16, 0
      %p113 = por %p111, %p112
      %p114 = scmp.ne.s32.totalorder %s106, %s108
      %p115 = scmp.eq.s32.totalorder %s21, 3
      %p116 = por %p114, %p115
      %p117 = scmp.ne.s32.totalorder %s108, %s109
      %p118 = scmp.eq.s32.totalorder %s21, 0
      %p119 = por %p117, %p118
      %p120 = scmp.ne.s32.totalorder %s108, %s109
      %p121 = scmp.eq.s32.totalorder %s22, 3
      %p122 = por %p120, %p121
      %p124 = scmp.ne.s32.totalorder %s109, %s123
      %p125 = scmp.eq.s32.totalorder %s22, 0
      %p126 = por %p124, %p125
      %s128 = sadd.s32 %s127, 1
      %p131 = scmp.eq.s32.totalorder %s16, 3
      %p132 = scmp.ne.s32.totalorder %s127, %s129
      %p133 = scmp.eq.s32.totalorder %s16, 0
      %p134 = por %p132, %p133
      %p135 = scmp.ne.s32.totalorder %s127, %s129
      %p136 = scmp.eq.s32.totalorder %s21, 3
      %p137 = por %p135, %p136
      %p138 = scmp.ne.s32.totalorder %s129, %s130
      %p139 = scmp.eq.s32.totalorder %s21, 0
      %p140 = por %p138, %p139
      %p141 = scmp.ne.s32.totalorder %s129, %s130
      %p142 = scmp.eq.s32.totalorder %s22, 3
      %p143 = por %p141, %p142
      %p145 = scmp.ne.s32.totalorder %s130, %s144
      %p146 = scmp.eq.s32.totalorder %s22, 0
      %p147 = por %p145, %p146
      %s149 = sadd.s32 %s148, 1
      %p152 = scmp.eq.s32.totalorder %s16, 3
      %p153 = scmp.ne.s32.totalorder %s148, %s150
      %p154 = scmp.eq.s32.totalorder %s16, 0
      %p155 = por %p153, %p154
      %p156 = scmp.ne.s32.totalorder %s148, %s150
      %p157 = scmp.eq.s32.totalorder %s21, 3
      %p158 = por %p156, %p157
      %p159 = scmp.ne.s32.totalorder %s150, %s151
      %p160 = scmp.eq.s32.totalorder %s21, 0
      %p161 = por %p159, %p160
      %p162 = scmp.ne.s32.totalorder %s150, %s151
      %p163 = scmp.eq.s32.totalorder %s22, 3
      %p164 = por %p162, %p163
      %p166 = scmp.ne.s32.totalorder %s151, %s165
      %p167 = scmp.eq.s32.totalorder %s22, 0
      %p168 = por %p166, %p167
      %s170 = sadd.s32 %s169, 1
      %p173 = scmp.eq.s32.totalorder %s16, 3
      %p174 = scmp.ne.s32.totalorder %s169, %s171
      %p175 = scmp.eq.s32.totalorder %s16, 0
      %p176 = por %p174, %p175
      %p177 = scmp.ne.s32.totalorder %s169, %s171
      %p178 = scmp.eq.s32.totalorder %s21, 3
      %p179 = por %p177, %p178
      %p180 = scmp.ne.s32.totalorder %s171, %s172
      %p181 = scmp.eq.s32.totalorder %s21, 0
      %p182 = por %p180, %p181
      %p183 = scmp.ne.s32.totalorder %s171, %s172
      %p184 = scmp.eq.s32.totalorder %s22, 3
      %p185 = por %p183, %p184
      %p187 = scmp.ne.s32.totalorder %s172, %s186
      %p188 = scmp.eq.s32.totalorder %s22, 0
      %p189 = por %p187, %p188
      %s190 = ssub.s32 %s23, %s35
      %p191 = scmp.eq.s32.totalorder %s190, 0
      %s193 = sadd.s32 %s192, 1
      %s194 = scalar_select %p191, %s192, %s193
      %p197 = pneg %p191
      %p198 = scmp.eq.s32.totalorder %s16, 3
      %p199 = por %p197, %p198
      %p200 = scmp.ne.s32.totalorder %s192, %s195
      %p201 = scmp.eq.s32.totalorder %s16, 0
      %p202 = por %p200, %p201
      %p203 = scmp.ne.s32.totalorder %s192, %s195
      %p204 = scmp.eq.s32.totalorder %s21, 3
      %p205 = por %p203, %p204
      %p206 = scmp.ne.s32.totalorder %s195, %s196
      %p207 = scmp.eq.s32.totalorder %s21, 0
      %p208 = por %p206, %p207
      %p209 = scmp.ne.s32.totalorder %s195, %s196
      %p210 = scmp.eq.s32.totalorder %s22, 3
      %p211 = por %p209, %p210
      %p213 = scmp.ne.s32.totalorder %s196, %s212
      %p214 = scmp.eq.s32.totalorder %s22, 0
      %p215 = por %p213, %p214
      %p216 = scmp.le.s32.totalorder 1, %s16
      %p217 = scmp.lt.s32.totalorder %s16, 5
      %p218 = pnand %p216, %p217
      %p219 = pneg %p218
      // Predicated region
      $region9: #{tpu_custom_call.1} parent=5 // pred_check
        _
      $region10: #{tpu_custom_call.1} parent=5 // pred_check_branch
        %221 = sbr.rel (%p218) target = $region12
      $region11: #{tpu_custom_call.1} parent=5 // pred_region
        %s222 = ssub.s32 %s16, 1
        // Predicated region
        $region13: #{tpu_custom_call.1} parent=11 // pred_check
          %p223 = pneg %p77
        $region14: #{tpu_custom_call.1} parent=11 // pred_check_branch
          %225 = sbr.rel (%p223) target = $region16
        $region15: #{tpu_custom_call.1} parent=11 // pred_region
          _
        $region16: #{tpu_custom_call.1} parent=11 // pred_fallthru
          _
        // Predicated region
        $region17: #{tpu_custom_call.1} parent=11 // pred_check
          %p226 = pneg %p98
        $region18: #{tpu_custom_call.1} parent=11 // pred_check_branch
          %228 = sbr.rel (%p226) target = $region20
        $region19: #{tpu_custom_call.1} parent=11 // pred_region
          _
        $region20: #{tpu_custom_call.1} parent=11 // pred_fallthru
          _
        // Predicated region
        $region21: #{tpu_custom_call.1} parent=11 // pred_check
          %p229 = pneg %p119
        $region22: #{tpu_custom_call.1} parent=11 // pred_check_branch
          %231 = sbr.rel (%p229) target = $region24
        $region23: #{tpu_custom_call.1} parent=11 // pred_region
          _
        $region24: #{tpu_custom_call.1} parent=11 // pred_fallthru
          _
        // Predicated region
        $region25: #{tpu_custom_call.1} parent=11 // pred_check
          %p232 = pneg %p140
        $region26: #{tpu_custom_call.1} parent=11 // pred_check_branch
          %234 = sbr.rel (%p232) target = $region28
        $region27: #{tpu_custom_call.1} parent=11 // pred_region
          _
        $region28: #{tpu_custom_call.1} parent=11 // pred_fallthru
          _
        // Predicated region
        $region29: #{tpu_custom_call.1} parent=11 // pred_check
          %p235 = pneg %p161
        $region30: #{tpu_custom_call.1} parent=11 // pred_check_branch
          %237 = sbr.rel (%p235) target = $region32
        $region31: #{tpu_custom_call.1} parent=11 // pred_region
          _
        $region32: #{tpu_custom_call.1} parent=11 // pred_fallthru
          _
        // Predicated region
        $region33: #{tpu_custom_call.1} parent=11 // pred_check
          %p238 = pneg %p182
        $region34: #{tpu_custom_call.1} parent=11 // pred_check_branch
          %240 = sbr.rel (%p238) target = $region36
        $region35: #{tpu_custom_call.1} parent=11 // pred_region
          _
        $region36: #{tpu_custom_call.1} parent=11 // pred_fallthru
          _
      $region12: #{tpu_custom_call.1} parent=5 // pred_fallthru
        _
      %p241 = scmp.lt.s32.totalorder %s16, 4
      // Predicated region
      $region37: #{tpu_custom_call.1} parent=5 // pred_check
        %p242 = pneg %p241
      $region38: #{tpu_custom_call.1} parent=5 // pred_check_branch
        %244 = sbr.rel (%p242) target = $region40
      $region39: #{tpu_custom_call.1} parent=5 // pred_region
        // Predicated region
        $region41: #{tpu_custom_call.1} parent=39 // pred_check
          %p245 = pneg %p50
        $region42: #{tpu_custom_call.1} parent=39 // pred_check_branch
          %247 = sbr.rel (%p245) target = $region44
        $region43: #{tpu_custom_call.1} parent=39 // pred_region
          %s248 = smul.u32 32, %s24
          %p249 = scmp.lt.s32.totalorder %s23, 1
          %s250 = scalar_select %p249, %s23, 1
          %p251 = scmp.lt.s32.totalorder %s248, 63
          %s252 = scalar_select %p251, %s248, 63
          %s253 = smul.addr %s250, 64
          %s254 = sadd.s32 %s252, %s253
          %s255 = smul.addr %s254, 8
          %s256 = scalar_lea.vmem %s0, %s255
          %s257 = smul.u32 32, %s24
        $region44: #{tpu_custom_call.1} parent=39 // pred_fallthru
          _
      $region40: #{tpu_custom_call.1} parent=5 // pred_fallthru
        _
      %p258 = scmp.le.s32.totalorder 1, %s16
      %p259 = scmp.lt.s32.totalorder %s16, 5
      %p260 = pnand %p258, %p259
      %p261 = pneg %p260
      // Predicated region
      $region45: #{tpu_custom_call.1} parent=5 // pred_check
        _
      $region46: #{tpu_custom_call.1} parent=5 // pred_check_branch
        %263 = sbr.rel (%p260) target = $region48
      $region47: #{tpu_custom_call.1} parent=5 // pred_region
        %s264 = ssub.s32 %s16, 1
        %s265 = smul.u32 32, %s26
        %p266 = scmp.lt.s32.totalorder %s25, 1
        %s267 = scalar_select %p266, %s25, 1
        %p268 = scmp.lt.s32.totalorder %s265, 63
        %s269 = scalar_select %p268, %s265, 63
        %s270 = smul.addr %s267, 64
        %s271 = sadd.s32 %s269, %s270
        %s272 = smul.addr %s271, 8
        %s273 = scalar_lea.vmem %s0, %s272
        %p274 = pneg %p56
        %p275 = pneg %p53
        %p276 = pneg %p77
        %p277 = pneg %p74
        %p278 = pneg %p98
        %p279 = pneg %p95
        %p280 = pneg %p119
        %p281 = pneg %p116
        %p282 = pneg %p140
        %p283 = pneg %p137
        %p284 = pneg %p161
        %p285 = pneg %p158
        %p286 = pneg %p182
        %p287 = pneg %p179
        %p288 = pneg %p208
        %p289 = pneg %p205
        %s290 = sand.u32 %s195, 1
        %s291 = scalar_lea.sflag [#allocation3], %s290
        %s292 = sand.u32 %s195, 1
        %s293 = smul.addr %s292, 64
        %s294 = scalar_lea.vmem [#allocation2], %s293
        %s295 = smul.u32 32, %s26
        %p296 = scmp.lt.s32.totalorder %s25, 1
        %s297 = scalar_select %p296, %s25, 1
        %p298 = scmp.lt.s32.totalorder %s295, 63
        %s299 = scalar_select %p298, %s295, 63
        %s300 = smul.addr %s297, 64
        %s301 = sadd.s32 %s299, %s300
        %s302 = smul.addr %s301, 8
        %s303 = scalar_lea.vmem %s0, %s302
        %s304 = smul.u32 32, %s26
        %p306 = scmp.eq.s32.totalorder %s26, 0
        // Predicated region
        $region49: #{tpu_custom_call.1} parent=47 // pred_check
          %p307 = pneg %p306
        $region50: #{tpu_custom_call.1} parent=47 // pred_check_branch
          %309 = sbr.rel (%p307) target = $region52
        $region51: #{tpu_custom_call.1} parent=47 // pred_region
          %310 = vst [vmem:[%s294] sm:$0xff] -inf
          %311 = vst [vmem:[%s294 + $0x8] sm:$0xff] -inf
          %312 = vst [vmem:[%s294 + $0x10] sm:$0xff] -inf
          %313 = vst [vmem:[%s294 + $0x18] sm:$0xff] -inf
          %314 = vst [vmem:[%s294 + $0x20] sm:$0xff] -inf
          %315 = vst [vmem:[%s294 + $0x28] sm:$0xff] -inf
          %316 = vst [vmem:[%s294 + $0x30] sm:$0xff] -inf
          %317 = vst [vmem:[%s294 + $0x38] sm:$0xff] -inf
        $region52: #{tpu_custom_call.1} parent=47 // pred_fallthru
          _
        %v318 = vld [vmem:[%s303] sm:$0xff]
        %v319 = vld [vmem:[%s303 + $0x8] sm:$0xff]
        %v320 = vld [vmem:[%s303 + $0x10] sm:$0xff]
        %v321 = vld [vmem:[%s303 + $0x18] sm:$0xff]
        %v322 = vld [vmem:[%s303 + $0x20] sm:$0xff]
        %v323 = vld [vmem:[%s303 + $0x28] sm:$0xff]
        %v324 = vld [vmem:[%s303 + $0x30] sm:$0xff]
        %v325 = vld [vmem:[%s303 + $0x38] sm:$0xff]
        %v326 = vld [vmem:[%s303 + $0x40] sm:$0xff]
        %v327 = vld [vmem:[%s303 + $0x48] sm:$0xff]
        %v328 = vld [vmem:[%s303 + $0x50] sm:$0xff]
        %v329 = vld [vmem:[%s303 + $0x58] sm:$0xff]
        %v330 = vld [vmem:[%s303 + $0x60] sm:$0xff]
        %v331 = vld [vmem:[%s303 + $0x68] sm:$0xff]
        %v332 = vld [vmem:[%s303 + $0x70] sm:$0xff]
        %v333 = vld [vmem:[%s303 + $0x78] sm:$0xff]
        %v334 = vld [vmem:[%s303 + $0x80] sm:$0xff]
        %v335 = vld [vmem:[%s303 + $0x88] sm:$0xff]
        %v336 = vld [vmem:[%s303 + $0x90] sm:$0xff]
        %v337 = vld [vmem:[%s303 + $0x98] sm:$0xff]
        %v338 = vld [vmem:[%s303 + $0xa0] sm:$0xff]
        %v339 = vld [vmem:[%s303 + $0xa8] sm:$0xff]
        %v340 = vld [vmem:[%s303 + $0xb0] sm:$0xff]
        %v341 = vld [vmem:[%s303 + $0xb8] sm:$0xff]
        %v342 = vld [vmem:[%s303 + $0xc0] sm:$0xff]
        %v343 = vld [vmem:[%s303 + $0xc8] sm:$0xff]
        %v344 = vld [vmem:[%s303 + $0xd0] sm:$0xff]
        %v345 = vld [vmem:[%s303 + $0xd8] sm:$0xff]
        %v346 = vld [vmem:[%s303 + $0xe0] sm:$0xff]
        %v347 = vld [vmem:[%s303 + $0xe8] sm:$0xff]
        %v348 = vld [vmem:[%s303 + $0xf0] sm:$0xff]
        %v349 = vld [vmem:[%s303 + $0xf8] sm:$0xff]
        %v350 = vpack.c.bf16 %v319, %v318
        %v351 = vpack.c.bf16 %v321, %v320
        %v352 = vpack.c.bf16 %v323, %v322
        %v353 = vpack.c.bf16 %v325, %v324
        %v354 = vpack.c.bf16 %v327, %v326
        %v355 = vpack.c.bf16 %v329, %v328
        %v356 = vpack.c.bf16 %v331, %v330
        %v357 = vpack.c.bf16 %v333, %v332
        %v358 = vpack.c.bf16 %v335, %v334
        %v359 = vpack.c.bf16 %v337, %v336
        %v360 = vpack.c.bf16 %v339, %v338
        %v361 = vpack.c.bf16 %v341, %v340
        %v362 = vpack.c.bf16 %v343, %v342
        %v363 = vpack.c.bf16 %v345, %v344
        %v364 = vpack.c.bf16 %v347, %v346
        %v365 = vpack.c.bf16 %v349, %v348
        %v366 = vld [vmem:[%s1] sm:$0x3]
        %v367 = vld [vmem:[%s2] sm:$0x1]
        %v369 = vperm.slane %v367, 0
        %vm371 = vcmask 23552
        %v373 = vsel %vm371, %v350, 0
        %v376 = vsel %vm371, %v351, 0
        %v379 = vsel %vm371, %v352, 0
        %v382 = vsel %vm371, %v353, 0
        %v385 = vsel %vm371, %v354, 0
        %v388 = vsel %vm371, %v355, 0
        %v391 = vsel %vm371, %v356, 0
        %v394 = vsel %vm371, %v357, 0
        %v397 = vsel %vm371, %v358, 0
        %v400 = vsel %vm371, %v359, 0
        %v403 = vsel %vm371, %v360, 0
        %v406 = vsel %vm371, %v361, 0
        %v409 = vsel %vm371, %v362, 0
        %v412 = vsel %vm371, %v363, 0
        %v415 = vsel %vm371, %v364, 0
        %v418 = vsel %vm371, %v365, 0
        %vm420 = vcmask 1040384
        %vm421 = vcmask 1041408
        %v422 = vsel %vm420, 4294967295, 65535
        %v423 = vsel %vm421, %v422, 0
        %v425 = vand.u32 %v366, %v423
        %427 = vmatpush.bf16.msra.mxu0 0
        %428 = vmatpush.bf16.msra.mxu0 0
        %429 = vmatpush.bf16.msra.mxu0 0
        %430 = vmatpush.bf16.msra.mxu0 0
        %431 = vmatpush.bf16.msra.mxu0 0
        %432 = vmatpush.bf16.msra.mxu0 0
        %433 = vmatpush.bf16.msra.mxu0 0
        %434 = vmatpush.bf16.msra.mxu0 %v425
        %435 = vmatmul.bf16.gmra.mxu0 %v373
        %v436 = vpop.f32.mrf.mxu0
        %v437 = vadd.f32 %v369, %v436
        %v438 = vpop.f32.mrf.mxu0
        %v439 = vadd.f32 %v369, %v438
        %440 = vmatmul.bf16.gmra.mxu0 %v376
        %v441 = vpop.f32.mrf.mxu0
        %v442 = vadd.f32 %v369, %v441
        %v443 = vpop.f32.mrf.mxu0
        %v444 = vadd.f32 %v369, %v443
        %445 = vmatmul.bf16.gmra.mxu0 %v379
        %v446 = vpop.f32.mrf.mxu0
        %v447 = vadd.f32 %v369, %v446
        %v448 = vpop.f32.mrf.mxu0
        %v449 = vadd.f32 %v369, %v448
        %450 = vmatmul.bf16.gmra.mxu0 %v382
        %v451 = vpop.f32.mrf.mxu0
        %v452 = vadd.f32 %v369, %v451
        %v453 = vpop.f32.mrf.mxu0
        %v454 = vadd.f32 %v369, %v453
        %455 = vmatmul.bf16.gmra.mxu0 %v385
        %v456 = vpop.f32.mrf.mxu0
        %v457 = vadd.f32 %v369, %v456
        %v458 = vpop.f32.mrf.mxu0
        %v459 = vadd.f32 %v369, %v458
        %460 = vmatmul.bf16.gmra.mxu0 %v388
        %v461 = vpop.f32.mrf.mxu0
        %v462 = vadd.f32 %v369, %v461
        %v463 = vpop.f32.mrf.mxu0
        %v464 = vadd.f32 %v369, %v463
        %465 = vmatmul.bf16.gmra.mxu0 %v391
        %v466 = vpop.f32.mrf.mxu0
        %v467 = vadd.f32 %v369, %v466
        %v468 = vpop.f32.mrf.mxu0
        %v469 = vadd.f32 %v369, %v468
        %470 = vmatmul.bf16.gmra.mxu0 %v394
        %v471 = vpop.f32.mrf.mxu0
        %v472 = vadd.f32 %v369, %v471
        %v473 = vpop.f32.mrf.mxu0
        %v474 = vadd.f32 %v369, %v473
        %475 = vmatmul.bf16.gmra.mxu0 %v397
        %v476 = vpop.f32.mrf.mxu0
        %v477 = vadd.f32 %v369, %v476
        %v478 = vpop.f32.mrf.mxu0
        %v479 = vadd.f32 %v369, %v478
        %480 = vmatmul.bf16.gmra.mxu0 %v400
        %v481 = vpop.f32.mrf.mxu0
        %v482 = vadd.f32 %v369, %v481
        %v483 = vpop.f32.mrf.mxu0
        %v484 = vadd.f32 %v369, %v483
        %485 = vmatmul.bf16.gmra.mxu0 %v403
        %v486 = vpop.f32.mrf.mxu0
        %v487 = vadd.f32 %v369, %v486
        %v488 = vpop.f32.mrf.mxu0
        %v489 = vadd.f32 %v369, %v488
        %490 = vmatmul.bf16.gmra.mxu0 %v406
        %v491 = vpop.f32.mrf.mxu0
        %v492 = vadd.f32 %v369, %v491
        %v493 = vpop.f32.mrf.mxu0
        %v494 = vadd.f32 %v369, %v493
        %495 = vmatmul.bf16.gmra.mxu0 %v409
        %v496 = vpop.f32.mrf.mxu0
        %v497 = vadd.f32 %v369, %v496
        %v498 = vpop.f32.mrf.mxu0
        %v499 = vadd.f32 %v369, %v498
        %500 = vmatmul.bf16.gmra.mxu0 %v412
        %v501 = vpop.f32.mrf.mxu0
        %v502 = vadd.f32 %v369, %v501
        %v503 = vpop.f32.mrf.mxu0
        %v504 = vadd.f32 %v369, %v503
        %505 = vmatmul.bf16.gmra.mxu0 %v415
        %v506 = vpop.f32.mrf.mxu0
        %v507 = vadd.f32 %v369, %v506
        %v508 = vpop.f32.mrf.mxu0
        %v509 = vadd.f32 %v369, %v508
        %510 = vmatmul.bf16.gmra.mxu0 %v418
        %v511 = vpop.f32.mrf.mxu0
        %v512 = vadd.f32 %v369, %v511
        %v513 = vpop.f32.mrf.mxu0
        %v514 = vadd.f32 %v369, %v513
        %515 = vdwg.mxu0
        %v516 = vmax.f32 %v437, 0.0
        %v517 = vmax.f32 %v439, 0.0
        %v518 = vmax.f32 %v442, 0.0
        %v519 = vmax.f32 %v444, 0.0
        %v520 = vmax.f32 %v447, 0.0
        %v521 = vmax.f32 %v449, 0.0
        %v522 = vmax.f32 %v452, 0.0
        %v523 = vmax.f32 %v454, 0.0
        %v524 = vmax.f32 %v457, 0.0
        %v525 = vmax.f32 %v459, 0.0
        %v526 = vmax.f32 %v462, 0.0
        %v527 = vmax.f32 %v464, 0.0
        %v528 = vmax.f32 %v467, 0.0
        %v529 = vmax.f32 %v469, 0.0
        %v530 = vmax.f32 %v472, 0.0
        %v531 = vmax.f32 %v474, 0.0
        %v532 = vmax.f32 %v477, 0.0
        %v533 = vmax.f32 %v479, 0.0
        %v534 = vmax.f32 %v482, 0.0
        %v535 = vmax.f32 %v484, 0.0
        %v536 = vmax.f32 %v487, 0.0
        %v537 = vmax.f32 %v489, 0.0
        %v538 = vmax.f32 %v492, 0.0
        %v539 = vmax.f32 %v494, 0.0
        %v540 = vmax.f32 %v497, 0.0
        %v541 = vmax.f32 %v499, 0.0
        %v542 = vmax.f32 %v502, 0.0
        %v543 = vmax.f32 %v504, 0.0
        %v544 = vmax.f32 %v507, 0.0
        %v545 = vmax.f32 %v509, 0.0
        %v546 = vmax.f32 %v512, 0.0
        %v547 = vmax.f32 %v514, 0.0
        %v548 = vpack.c.bf16 %v517, %v516
        %v549 = vpack.c.bf16 %v519, %v518
        %v550 = vpack.c.bf16 %v521, %v520
        %v551 = vpack.c.bf16 %v523, %v522
        %v552 = vpack.c.bf16 %v525, %v524
        %v553 = vpack.c.bf16 %v527, %v526
        %v554 = vpack.c.bf16 %v529, %v528
        %v555 = vpack.c.bf16 %v531, %v530
        %v556 = vpack.c.bf16 %v533, %v532
        %v557 = vpack.c.bf16 %v535, %v534
        %v558 = vpack.c.bf16 %v537, %v536
        %v559 = vpack.c.bf16 %v539, %v538
        %v560 = vpack.c.bf16 %v541, %v540
        %v561 = vpack.c.bf16 %v543, %v542
        %v562 = vpack.c.bf16 %v545, %v544
        %v563 = vpack.c.bf16 %v547, %v546
        %v564 = vld [vmem:[%s3] sm:$0xf]
        %v565 = vld [vmem:[%s3 + $0x4] sm:$0xf]
        %v566 = vld [vmem:[%s3 + $0x8] sm:$0xf]
        %v567 = vld [vmem:[%s3 + $0xc] sm:$0xf]
        %v568 = vld [vmem:[%s3 + $0x10] sm:$0xf]
        %v569 = vld [vmem:[%s3 + $0x14] sm:$0xf]
        %v570 = vld [vmem:[%s3 + $0x18] sm:$0xf]
        %v571 = vld [vmem:[%s3 + $0x1c] sm:$0xf]
        %v572 = vld [vmem:[%s4] sm:$0x1]
        %v574 = vperm.slane %v572, 0
        %v584 = vunpack.c.l.b16 %v564
        %v585 = vunpack.c.l.b16 %v565
        %v586 = vunpack.c.l.b16 %v566
        %v587 = vunpack.c.l.b16 %v567
        %v588 = vunpack.c.l.b16 %v568
        %v589 = vunpack.c.l.b16 %v569
        %v590 = vunpack.c.l.b16 %v570
        %v591 = vunpack.c.l.b16 %v571
        %v592 = vpack.c.b16 %v585, %v584
        %v593 = vpack.c.b16 %v587, %v586
        %v594 = vpack.c.b16 %v589, %v588
        %v595 = vpack.c.b16 %v591, %v590
        %vm600 = vcmask 523264
        %v602 = vsel %vm600, %v548, 0
        %v605 = vsel %vm600, %v549, 0
        %v608 = vsel %vm600, %v550, 0
        %v611 = vsel %vm600, %v551, 0
        %v614 = vsel %vm600, %v552, 0
        %v617 = vsel %vm600, %v553, 0
        %v620 = vsel %vm600, %v554, 0
        %v623 = vsel %vm600, %v555, 0
        %v626 = vsel %vm600, %v556, 0
        %v629 = vsel %vm600, %v557, 0
        %v632 = vsel %vm600, %v558, 0
        %v635 = vsel %vm600, %v559, 0
        %v638 = vsel %vm600, %v560, 0
        %v641 = vsel %vm600, %v561, 0
        %v644 = vsel %vm600, %v562, 0
        %v647 = vsel %vm600, %v563, 0
        %649 = vmatpush.bf16.msra.mxu0 0
        %650 = vmatpush.bf16.msra.mxu0 0
        %651 = vmatpush.bf16.msra.mxu0 0
        %652 = vmatpush.bf16.msra.mxu0 0
        %653 = vmatpush.bf16.msra.mxu0 %v595
        %654 = vmatpush.bf16.msra.mxu0 %v594
        %655 = vmatpush.bf16.msra.mxu0 %v593
        %656 = vmatpush.bf16.msra.mxu0 %v592
        %657 = vmatmul.bf16.gmra.mxu0 %v602
        %v658 = vpop.f32.mrf.mxu0
        %v659 = vadd.f32 %v574, %v658
        %v660 = vpop.f32.mrf.mxu0
        %v661 = vadd.f32 %v574, %v660
        %662 = vmatmul.bf16.gmra.mxu0 %v605
        %v663 = vpop.f32.mrf.mxu0
        %v664 = vadd.f32 %v574, %v663
        %v665 = vpop.f32.mrf.mxu0
        %v666 = vadd.f32 %v574, %v665
        %667 = vmatmul.bf16.gmra.mxu0 %v608
        %v668 = vpop.f32.mrf.mxu0
        %v669 = vadd.f32 %v574, %v668
        %v670 = vpop.f32.mrf.mxu0
        %v671 = vadd.f32 %v574, %v670
        %672 = vmatmul.bf16.gmra.mxu0 %v611
        %v673 = vpop.f32.mrf.mxu0
        %v674 = vadd.f32 %v574, %v673
        %v675 = vpop.f32.mrf.mxu0
        %v676 = vadd.f32 %v574, %v675
        %677 = vmatmul.bf16.gmra.mxu0 %v614
        %v678 = vpop.f32.mrf.mxu0
        %v679 = vadd.f32 %v574, %v678
        %v680 = vpop.f32.mrf.mxu0
        %v681 = vadd.f32 %v574, %v680
        %682 = vmatmul.bf16.gmra.mxu0 %v617
        %v683 = vpop.f32.mrf.mxu0
        %v684 = vadd.f32 %v574, %v683
        %v685 = vpop.f32.mrf.mxu0
        %v686 = vadd.f32 %v574, %v685
        %687 = vmatmul.bf16.gmra.mxu0 %v620
        %v688 = vpop.f32.mrf.mxu0
        %v689 = vadd.f32 %v574, %v688
        %v690 = vpop.f32.mrf.mxu0
        %v691 = vadd.f32 %v574, %v690
        %692 = vmatmul.bf16.gmra.mxu0 %v623
        %v693 = vpop.f32.mrf.mxu0
        %v694 = vadd.f32 %v574, %v693
        %v695 = vpop.f32.mrf.mxu0
        %v696 = vadd.f32 %v574, %v695
        %697 = vmatmul.bf16.gmra.mxu0 %v626
        %v698 = vpop.f32.mrf.mxu0
        %v699 = vadd.f32 %v574, %v698
        %v700 = vpop.f32.mrf.mxu0
        %v701 = vadd.f32 %v574, %v700
        %702 = vmatmul.bf16.gmra.mxu0 %v629
        %v703 = vpop.f32.mrf.mxu0
        %v704 = vadd.f32 %v574, %v703
        %v705 = vpop.f32.mrf.mxu0
        %v706 = vadd.f32 %v574, %v705
        %707 = vmatmul.bf16.gmra.mxu0 %v632
        %v708 = vpop.f32.mrf.mxu0
        %v709 = vadd.f32 %v574, %v708
        %v710 = vpop.f32.mrf.mxu0
        %v711 = vadd.f32 %v574, %v710
        %712 = vmatmul.bf16.gmra.mxu0 %v635
        %v713 = vpop.f32.mrf.mxu0
        %v714 = vadd.f32 %v574, %v713
        %v715 = vpop.f32.mrf.mxu0
        %v716 = vadd.f32 %v574, %v715
        %717 = vmatmul.bf16.gmra.mxu0 %v638
        %v718 = vpop.f32.mrf.mxu0
        %v719 = vadd.f32 %v574, %v718
        %v720 = vpop.f32.mrf.mxu0
        %v721 = vadd.f32 %v574, %v720
        %722 = vmatmul.bf16.gmra.mxu0 %v641
        %v723 = vpop.f32.mrf.mxu0
        %v724 = vadd.f32 %v574, %v723
        %v725 = vpop.f32.mrf.mxu0
        %v726 = vadd.f32 %v574, %v725
        %727 = vmatmul.bf16.gmra.mxu0 %v644
        %v728 = vpop.f32.mrf.mxu0
        %v729 = vadd.f32 %v574, %v728
        %v730 = vpop.f32.mrf.mxu0
        %v731 = vadd.f32 %v574, %v730
        %732 = vmatmul.bf16.gmra.mxu0 %v647
        %v733 = vpop.f32.mrf.mxu0
        %v734 = vadd.f32 %v574, %v733
        %v735 = vpop.f32.mrf.mxu0
        %v736 = vadd.f32 %v574, %v735
        %737 = vdwg.mxu0
        %v738 = vmax.f32 %v659, 0.0
        %v739 = vmax.f32 %v661, 0.0
        %v740 = vmax.f32 %v664, 0.0
        %v741 = vmax.f32 %v666, 0.0
        %v742 = vmax.f32 %v669, 0.0
        %v743 = vmax.f32 %v671, 0.0
        %v744 = vmax.f32 %v674, 0.0
        %v745 = vmax.f32 %v676, 0.0
        %v746 = vmax.f32 %v679, 0.0
        %v747 = vmax.f32 %v681, 0.0
        %v748 = vmax.f32 %v684, 0.0
        %v749 = vmax.f32 %v686, 0.0
        %v750 = vmax.f32 %v689, 0.0
        %v751 = vmax.f32 %v691, 0.0
        %v752 = vmax.f32 %v694, 0.0
        %v753 = vmax.f32 %v696, 0.0
        %v754 = vmax.f32 %v699, 0.0
        %v755 = vmax.f32 %v701, 0.0
        %v756 = vmax.f32 %v704, 0.0
        %v757 = vmax.f32 %v706, 0.0
        %v758 = vmax.f32 %v709, 0.0
        %v759 = vmax.f32 %v711, 0.0
        %v760 = vmax.f32 %v714, 0.0
        %v761 = vmax.f32 %v716, 0.0
        %v762 = vmax.f32 %v719, 0.0
        %v763 = vmax.f32 %v721, 0.0
        %v764 = vmax.f32 %v724, 0.0
        %v765 = vmax.f32 %v726, 0.0
        %v766 = vmax.f32 %v729, 0.0
        %v767 = vmax.f32 %v731, 0.0
        %v768 = vmax.f32 %v734, 0.0
        %v769 = vmax.f32 %v736, 0.0
        %v770 = vpack.c.bf16 %v739, %v738
        %v771 = vpack.c.bf16 %v741, %v740
        %v772 = vpack.c.bf16 %v743, %v742
        %v773 = vpack.c.bf16 %v745, %v744
        %v774 = vpack.c.bf16 %v747, %v746
        %v775 = vpack.c.bf16 %v749, %v748
        %v776 = vpack.c.bf16 %v751, %v750
        %v777 = vpack.c.bf16 %v753, %v752
        %v778 = vpack.c.bf16 %v755, %v754
        %v779 = vpack.c.bf16 %v757, %v756
        %v780 = vpack.c.bf16 %v759, %v758
        %v781 = vpack.c.bf16 %v761, %v760
        %v782 = vpack.c.bf16 %v763, %v762
        %v783 = vpack.c.bf16 %v765, %v764
        %v784 = vpack.c.bf16 %v767, %v766
        %v785 = vpack.c.bf16 %v769, %v768
        %v786 = vld [vmem:[%s5] sm:$0xff]
        %v787 = vld [vmem:[%s5 + $0x8] sm:$0xff]
        %v788 = vld [vmem:[%s5 + $0x10] sm:$0xff]
        %v789 = vld [vmem:[%s5 + $0x18] sm:$0xff]
        %v790 = vld [vmem:[%s5 + $0x20] sm:$0xff]
        %v791 = vld [vmem:[%s5 + $0x28] sm:$0xff]
        %v792 = vld [vmem:[%s5 + $0x30] sm:$0xff]
        %v793 = vld [vmem:[%s5 + $0x38] sm:$0xff]
        %v794 = vld [vmem:[%s5 + $0x40] sm:$0xff]
        %v795 = vld [vmem:[%s5 + $0x48] sm:$0xff]
        %v796 = vld [vmem:[%s5 + $0x50] sm:$0xff]
        %v797 = vld [vmem:[%s5 + $0x58] sm:$0xff]
        %v798 = vld [vmem:[%s5 + $0x60] sm:$0xff]
        %v799 = vld [vmem:[%s5 + $0x68] sm:$0xff]
        %v800 = vld [vmem:[%s5 + $0x70] sm:$0xff]
        %v801 = vld [vmem:[%s5 + $0x78] sm:$0xff]
        %v802 = vld [vmem:[%s5 + $0x80] sm:$0xff]
        %v803 = vld [vmem:[%s5 + $0x88] sm:$0xff]
        %v804 = vld [vmem:[%s5 + $0x90] sm:$0xff]
        %v805 = vld [vmem:[%s5 + $0x98] sm:$0xff]
        %v806 = vld [vmem:[%s5 + $0xa0] sm:$0xff]
        %v807 = vld [vmem:[%s5 + $0xa8] sm:$0xff]
        %v808 = vld [vmem:[%s5 + $0xb0] sm:$0xff]
        %v809 = vld [vmem:[%s5 + $0xb8] sm:$0xff]
        %v810 = vld [vmem:[%s5 + $0xc0] sm:$0xff]
        %v811 = vld [vmem:[%s5 + $0xc8] sm:$0xff]
        %v812 = vld [vmem:[%s5 + $0xd0] sm:$0xff]
        %v813 = vld [vmem:[%s5 + $0xd8] sm:$0xff]
        %v814 = vld [vmem:[%s5 + $0xe0] sm:$0xff]
        %v815 = vld [vmem:[%s5 + $0xe8] sm:$0xff]
        %v816 = vld [vmem:[%s5 + $0xf0] sm:$0xff]
        %v817 = vld [vmem:[%s5 + $0xf8] sm:$0xff]
        %v818 = vld [vmem:[%s5 + $0x100] sm:$0xff]
        %v819 = vld [vmem:[%s5 + $0x108] sm:$0xff]
        %v820 = vld [vmem:[%s5 + $0x110] sm:$0xff]
        %v821 = vld [vmem:[%s5 + $0x118] sm:$0xff]
        %v822 = vld [vmem:[%s5 + $0x120] sm:$0xff]
        %v823 = vld [vmem:[%s5 + $0x128] sm:$0xff]
        %v824 = vld [vmem:[%s5 + $0x130] sm:$0xff]
        %v825 = vld [vmem:[%s5 + $0x138] sm:$0xff]
        %v826 = vld [vmem:[%s5 + $0x140] sm:$0xff]
        %v827 = vld [vmem:[%s5 + $0x148] sm:$0xff]
        %v828 = vld [vmem:[%s5 + $0x150] sm:$0xff]
        %v829 = vld [vmem:[%s5 + $0x158] sm:$0xff]
        %v830 = vld [vmem:[%s5 + $0x160] sm:$0xff]
        %v831 = vld [vmem:[%s5 + $0x168] sm:$0xff]
        %v832 = vld [vmem:[%s5 + $0x170] sm:$0xff]
        %v833 = vld [vmem:[%s5 + $0x178] sm:$0xff]
        %v834 = vld [vmem:[%s5 + $0x180] sm:$0xff]
        %v835 = vld [vmem:[%s5 + $0x188] sm:$0xff]
        %v836 = vld [vmem:[%s5 + $0x190] sm:$0xff]
        %v837 = vld [vmem:[%s5 + $0x198] sm:$0xff]
        %v838 = vld [vmem:[%s5 + $0x1a0] sm:$0xff]
        %v839 = vld [vmem:[%s5 + $0x1a8] sm:$0xff]
        %v840 = vld [vmem:[%s5 + $0x1b0] sm:$0xff]
        %v841 = vld [vmem:[%s5 + $0x1b8] sm:$0xff]
        %v842 = vld [vmem:[%s5 + $0x1c0] sm:$0xff]
        %v843 = vld [vmem:[%s5 + $0x1c8] sm:$0xff]
        %v844 = vld [vmem:[%s5 + $0x1d0] sm:$0xff]
        %v845 = vld [vmem:[%s5 + $0x1d8] sm:$0xff]
        %v846 = vld [vmem:[%s5 + $0x1e0] sm:$0xff]
        %v847 = vld [vmem:[%s5 + $0x1e8] sm:$0xff]
        %v848 = vld [vmem:[%s5 + $0x1f0] sm:$0xff]
        %v849 = vld [vmem:[%s5 + $0x1f8] sm:$0xff]
        %v850 = vld [vmem:[%s6] sm:$0xff]
        %v852 = vperm.slane %v850, 0
        %v853 = vperm.slane %v850, 1
        %v854 = vperm.slane %v850, 2
        %v855 = vperm.slane %v850, 3
        %v856 = vperm.slane %v850, 4
        %v857 = vperm.slane %v850, 5
        %v858 = vperm.slane %v850, 6
        %v859 = vperm.slane %v850, 7
        %v932 = vunpack.c.l.b16 %v786
        %v933 = vunpack.c.h.b16 %v786
        %v934 = vunpack.c.l.b16 %v787
        %v935 = vunpack.c.h.b16 %v787
        %v936 = vunpack.c.l.b16 %v788
        %v937 = vunpack.c.h.b16 %v788
        %v938 = vunpack.c.l.b16 %v789
        %v939 = vunpack.c.h.b16 %v789
        %v940 = vunpack.c.l.b16 %v790
        %v941 = vunpack.c.h.b16 %v790
        %v942 = vunpack.c.l.b16 %v791
        %v943 = vunpack.c.h.b16 %v791
        %v944 = vunpack.c.l.b16 %v792
        %v945 = vunpack.c.h.b16 %v792
        %v946 = vunpack.c.l.b16 %v793
        %v947 = vunpack.c.h.b16 %v793
        %v948 = vunpack.c.l.b16 %v794
        %v949 = vunpack.c.h.b16 %v794
        %v950 = vunpack.c.l.b16 %v795
        %v951 = vunpack.c.h.b16 %v795
        %v952 = vunpack.c.l.b16 %v796
        %v953 = vunpack.c.h.b16 %v796
        %v954 = vunpack.c.l.b16 %v797
        %v955 = vunpack.c.h.b16 %v797
        %v956 = vunpack.c.l.b16 %v798
        %v957 = vunpack.c.h.b16 %v798
        %v958 = vunpack.c.l.b16 %v799
        %v959 = vunpack.c.h.b16 %v799
        %v960 = vunpack.c.l.b16 %v800
        %v961 = vunpack.c.h.b16 %v800
        %v962 = vunpack.c.l.b16 %v801
        %v963 = vunpack.c.h.b16 %v801
        %v964 = vunpack.c.l.b16 %v802
        %v965 = vunpack.c.h.b16 %v802
        %v966 = vunpack.c.l.b16 %v803
        %v967 = vunpack.c.h.b16 %v803
        %v968 = vunpack.c.l.b16 %v804
        %v969 = vunpack.c.h.b16 %v804
        %v970 = vunpack.c.l.b16 %v805
        %v971 = vunpack.c.h.b16 %v805
        %v972 = vunpack.c.l.b16 %v806
        %v973 = vunpack.c.h.b16 %v806
        %v974 = vunpack.c.l.b16 %v807
        %v975 = vunpack.c.h.b16 %v807
        %v976 = vunpack.c.l.b16 %v808
        %v977 = vunpack.c.h.b16 %v808
        %v978 = vunpack.c.l.b16 %v809
        %v979 = vunpack.c.h.b16 %v809
        %v980 = vunpack.c.l.b16 %v810
        %v981 = vunpack.c.h.b16 %v810
        %v982 = vunpack.c.l.b16 %v811
        %v983 = vunpack.c.h.b16 %v811
        %v984 = vunpack.c.l.b16 %v812
        %v985 = vunpack.c.h.b16 %v812
        %v986 = vunpack.c.l.b16 %v813
        %v987 = vunpack.c.h.b16 %v813
        %v988 = vunpack.c.l.b16 %v814
        %v989 = vunpack.c.h.b16 %v814
        %v990 = vunpack.c.l.b16 %v815
        %v991 = vunpack.c.h.b16 %v815
        %v992 = vunpack.c.l.b16 %v816
        %v993 = vunpack.c.h.b16 %v816
        %v994 = vunpack.c.l.b16 %v817
        %v995 = vunpack.c.h.b16 %v817
        %v996 = vunpack.c.l.b16 %v818
        %v997 = vunpack.c.h.b16 %v818
        %v998 = vunpack.c.l.b16 %v819
        %v999 = vunpack.c.h.b16 %v819
        %v1000 = vunpack.c.l.b16 %v820
        %v1001 = vunpack.c.h.b16 %v820
        %v1002 = vunpack.c.l.b16 %v821
        %v1003 = vunpack.c.h.b16 %v821
        %v1004 = vunpack.c.l.b16 %v822
        %v1005 = vunpack.c.h.b16 %v822
        %v1006 = vunpack.c.l.b16 %v823
        %v1007 = vunpack.c.h.b16 %v823
        %v1008 = vunpack.c.l.b16 %v824
        %v1009 = vunpack.c.h.b16 %v824
        %v1010 = vunpack.c.l.b16 %v825
        %v1011 = vunpack.c.h.b16 %v825
        %v1012 = vunpack.c.l.b16 %v826
        %v1013 = vunpack.c.h.b16 %v826
        %v1014 = vunpack.c.l.b16 %v827
        %v1015 = vunpack.c.h.b16 %v827
        %v1016 = vunpack.c.l.b16 %v828
        %v1017 = vunpack.c.h.b16 %v828
        %v1018 = vunpack.c.l.b16 %v829
        %v1019 = vunpack.c.h.b16 %v829
        %v1020 = vunpack.c.l.b16 %v830
        %v1021 = vunpack.c.h.b16 %v830
        %v1022 = vunpack.c.l.b16 %v831
        %v1023 = vunpack.c.h.b16 %v831
        %v1024 = vunpack.c.l.b16 %v832
        %v1025 = vunpack.c.h.b16 %v832
        %v1026 = vunpack.c.l.b16 %v833
        %v1027 = vunpack.c.h.b16 %v833
        %v1028 = vunpack.c.l.b16 %v834
        %v1029 = vunpack.c.h.b16 %v834
        %v1030 = vunpack.c.l.b16 %v835
        %v1031 = vunpack.c.h.b16 %v835
        %v1032 = vunpack.c.l.b16 %v836
        %v1033 = vunpack.c.h.b16 %v836
        %v1034 = vunpack.c.l.b16 %v837
        %v1035 = vunpack.c.h.b16 %v837
        %v1036 = vunpack.c.l.b16 %v838
        %v1037 = vunpack.c.h.b16 %v838
        %v1038 = vunpack.c.l.b16 %v839
        %v1039 = vunpack.c.h.b16 %v839
        %v1040 = vunpack.c.l.b16 %v840
        %v1041 = vunpack.c.h.b16 %v840
        %v1042 = vunpack.c.l.b16 %v841
        %v1043 = vunpack.c.h.b16 %v841
        %v1044 = vunpack.c.l.b16 %v842
        %v1045 = vunpack.c.h.b16 %v842
        %v1046 = vunpack.c.l.b16 %v843
        %v1047 = vunpack.c.h.b16 %v843
        %v1048 = vunpack.c.l.b16 %v844
        %v1049 = vunpack.c.h.b16 %v844
        %v1050 = vunpack.c.l.b16 %v845
        %v1051 = vunpack.c.h.b16 %v845
        %v1052 = vunpack.c.l.b16 %v846
        %v1053 = vunpack.c.h.b16 %v846
        %v1054 = vunpack.c.l.b16 %v847
        %v1055 = vunpack.c.h.b16 %v847
        %v1056 = vunpack.c.l.b16 %v848
        %v1057 = vunpack.c.h.b16 %v848
        %v1058 = vunpack.c.l.b16 %v849
        %v1059 = vunpack.c.h.b16 %v849
        %v1060 = vpack.c.b16 %v940, %v932
        %v1061 = vpack.c.b16 %v941, %v933
        %v1062 = vpack.c.b16 %v942, %v934
        %v1063 = vpack.c.b16 %v943, %v935
        %v1064 = vpack.c.b16 %v944, %v936
        %v1065 = vpack.c.b16 %v945, %v937
        %v1066 = vpack.c.b16 %v946, %v938
        %v1067 = vpack.c.b16 %v947, %v939
        %v1068 = vpack.c.b16 %v956, %v948
        %v1069 = vpack.c.b16 %v957, %v949
        %v1070 = vpack.c.b16 %v958, %v950
        %v1071 = vpack.c.b16 %v959, %v951
        %v1072 = vpack.c.b16 %v960, %v952
        %v1073 = vpack.c.b16 %v961, %v953
        %v1074 = vpack.c.b16 %v962, %v954
        %v1075 = vpack.c.b16 %v963, %v955
        %v1076 = vpack.c.b16 %v972, %v964
        %v1077 = vpack.c.b16 %v973, %v965
        %v1078 = vpack.c.b16 %v974, %v966
        %v1079 = vpack.c.b16 %v975, %v967
        %v1080 = vpack.c.b16 %v976, %v968
        %v1081 = vpack.c.b16 %v977, %v969
        %v1082 = vpack.c.b16 %v978, %v970
        %v1083 = vpack.c.b16 %v979, %v971
        %v1084 = vpack.c.b16 %v988, %v980
        %v1085 = vpack.c.b16 %v989, %v981
        %v1086 = vpack.c.b16 %v990, %v982
        %v1087 = vpack.c.b16 %v991, %v983
        %v1088 = vpack.c.b16 %v992, %v984
        %v1089 = vpack.c.b16 %v993, %v985
        %v1090 = vpack.c.b16 %v994, %v986
        %v1091 = vpack.c.b16 %v995, %v987
        %v1092 = vpack.c.b16 %v1004, %v996
        %v1093 = vpack.c.b16 %v1005, %v997
        %v1094 = vpack.c.b16 %v1006, %v998
        %v1095 = vpack.c.b16 %v1007, %v999
        %v1096 = vpack.c.b16 %v1008, %v1000
        %v1097 = vpack.c.b16 %v1009, %v1001
        %v1098 = vpack.c.b16 %v1010, %v1002
        %v1099 = vpack.c.b16 %v1011, %v1003
        %v1100 = vpack.c.b16 %v1020, %v1012
        %v1101 = vpack.c.b16 %v1021, %v1013
        %v1102 = vpack.c.b16 %v1022, %v1014
        %v1103 = vpack.c.b16 %v1023, %v1015
        %v1104 = vpack.c.b16 %v1024, %v1016
        %v1105 = vpack.c.b16 %v1025, %v1017
        %v1106 = vpack.c.b16 %v1026, %v1018
        %v1107 = vpack.c.b16 %v1027, %v1019
        %v1108 = vpack.c.b16 %v1036, %v1028
        %v1109 = vpack.c.b16 %v1037, %v1029
        %v1110 = vpack.c.b16 %v1038, %v1030
        %v1111 = vpack.c.b16 %v1039, %v1031
        %v1112 = vpack.c.b16 %v1040, %v1032
        %v1113 = vpack.c.b16 %v1041, %v1033
        %v1114 = vpack.c.b16 %v1042, %v1034
        %v1115 = vpack.c.b16 %v1043, %v1035
        %v1116 = vpack.c.b16 %v1052, %v1044
        %v1117 = vpack.c.b16 %v1053, %v1045
        %v1118 = vpack.c.b16 %v1054, %v1046
        %v1119 = vpack.c.b16 %v1055, %v1047
        %v1120 = vpack.c.b16 %v1056, %v1048
        %v1121 = vpack.c.b16 %v1057, %v1049
        %v1122 = vpack.c.b16 %v1058, %v1050
        %v1123 = vpack.c.b16 %v1059, %v1051
        %1188 = vmatpush.bf16.msra.mxu0 %v1116
        %1189 = vmatpush.bf16.msra.mxu0 %v1108
        %1190 = vmatpush.bf16.msra.mxu0 %v1100
        %1191 = vmatpush.bf16.msra.mxu0 %v1092
        %1192 = vmatpush.bf16.msra.mxu0 %v1084
        %1193 = vmatpush.bf16.msra.mxu0 %v1076
        %1194 = vmatpush.bf16.msra.mxu0 %v1068
        %1195 = vmatpush.bf16.msra.mxu0 %v1060
        %1196 = vmatmul.bf16.gmra.mxu0 %v770
        %v1197 = vpop.f32.mrf.mxu0
        %v1198 = vadd.f32 %v852, %v1197
        %v1199 = vpop.f32.mrf.mxu0
        %v1200 = vadd.f32 %v852, %v1199
        %1201 = vmatmul.bf16.gmra.mxu0 %v771
        %v1202 = vpop.f32.mrf.mxu0
        %v1203 = vadd.f32 %v852, %v1202
        %v1204 = vpop.f32.mrf.mxu0
        %v1205 = vadd.f32 %v852, %v1204
        %1206 = vmatmul.bf16.gmra.mxu0 %v772
        %v1207 = vpop.f32.mrf.mxu0
        %v1208 = vadd.f32 %v852, %v1207
        %v1209 = vpop.f32.mrf.mxu0
        %v1210 = vadd.f32 %v852, %v1209
        %1211 = vmatmul.bf16.gmra.mxu0 %v773
        %v1212 = vpop.f32.mrf.mxu0
        %v1213 = vadd.f32 %v852, %v1212
        %v1214 = vpop.f32.mrf.mxu0
        %v1215 = vadd.f32 %v852, %v1214
        %1216 = vmatmul.bf16.gmra.mxu0 %v774
        %v1217 = vpop.f32.mrf.mxu0
        %v1218 = vadd.f32 %v852, %v1217
        %v1219 = vpop.f32.mrf.mxu0
        %v1220 = vadd.f32 %v852, %v1219
        %1221 = vmatmul.bf16.gmra.mxu0 %v775
        %v1222 = vpop.f32.mrf.mxu0
        %v1223 = vadd.f32 %v852, %v1222
        %v1224 = vpop.f32.mrf.mxu0
        %v1225 = vadd.f32 %v852, %v1224
        %1226 = vmatmul.bf16.gmra.mxu0 %v776
        %v1227 = vpop.f32.mrf.mxu0
        %v1228 = vadd.f32 %v852, %v1227
        %v1229 = vpop.f32.mrf.mxu0
        %v1230 = vadd.f32 %v852, %v1229
        %1231 = vmatmul.bf16.gmra.mxu0 %v777
        %v1232 = vpop.f32.mrf.mxu0
        %v1233 = vadd.f32 %v852, %v1232
        %v1234 = vpop.f32.mrf.mxu0
        %v1235 = vadd.f32 %v852, %v1234
        %1236 = vmatmul.bf16.gmra.mxu0 %v778
        %v1237 = vpop.f32.mrf.mxu0
        %v1238 = vadd.f32 %v852, %v1237
        %v1239 = vpop.f32.mrf.mxu0
        %v1240 = vadd.f32 %v852, %v1239
        %1241 = vmatmul.bf16.gmra.mxu0 %v779
        %v1242 = vpop.f32.mrf.mxu0
        %v1243 = vadd.f32 %v852, %v1242
        %v1244 = vpop.f32.mrf.mxu0
        %v1245 = vadd.f32 %v852, %v1244
        %1246 = vmatmul.bf16.gmra.mxu0 %v780
        %v1247 = vpop.f32.mrf.mxu0
        %v1248 = vadd.f32 %v852, %v1247
        %v1249 = vpop.f32.mrf.mxu0
        %v1250 = vadd.f32 %v852, %v1249
        %1251 = vmatmul.bf16.gmra.mxu0 %v781
        %v1252 = vpop.f32.mrf.mxu0
        %v1253 = vadd.f32 %v852, %v1252
        %v1254 = vpop.f32.mrf.mxu0
        %v1255 = vadd.f32 %v852, %v1254
        %1256 = vmatmul.bf16.gmra.mxu0 %v782
        %v1257 = vpop.f32.mrf.mxu0
        %v1258 = vadd.f32 %v852, %v1257
        %v1259 = vpop.f32.mrf.mxu0
        %v1260 = vadd.f32 %v852, %v1259
        %1261 = vmatmul.bf16.gmra.mxu0 %v783
        %v1262 = vpop.f32.mrf.mxu0
        %v1263 = vadd.f32 %v852, %v1262
        %v1264 = vpop.f32.mrf.mxu0
        %v1265 = vadd.f32 %v852, %v1264
        %1266 = vmatmul.bf16.gmra.mxu0 %v784
        %v1267 = vpop.f32.mrf.mxu0
        %v1268 = vadd.f32 %v852, %v1267
        %v1269 = vpop.f32.mrf.mxu0
        %v1270 = vadd.f32 %v852, %v1269
        %1271 = vmatmul.bf16.gmra.mxu0 %v785
        %v1272 = vpop.f32.mrf.mxu0
        %v1273 = vadd.f32 %v852, %v1272
        %v1274 = vpop.f32.mrf.mxu0
        %v1275 = vadd.f32 %v852, %v1274
        %1276 = vdwg.mxu0
        %1277 = vmatpush.bf16.msra.mxu0 %v1117
        %1278 = vmatpush.bf16.msra.mxu0 %v1109
        %1279 = vmatpush.bf16.msra.mxu0 %v1101
        %1280 = vmatpush.bf16.msra.mxu0 %v1093
        %1281 = vmatpush.bf16.msra.mxu0 %v1085
        %1282 = vmatpush.bf16.msra.mxu0 %v1077
        %1283 = vmatpush.bf16.msra.mxu0 %v1069
        %1284 = vmatpush.bf16.msra.mxu0 %v1061
        %1285 = vmatmul.bf16.gmra.mxu0 %v770
        %v1286 = vpop.f32.mrf.mxu0
        %v1287 = vadd.f32 %v853, %v1286
        %v1288 = vpop.f32.mrf.mxu0
        %v1289 = vadd.f32 %v853, %v1288
        %1290 = vmatmul.bf16.gmra.mxu0 %v771
        %v1291 = vpop.f32.mrf.mxu0
        %v1292 = vadd.f32 %v853, %v1291
        %v1293 = vpop.f32.mrf.mxu0
        %v1294 = vadd.f32 %v853, %v1293
        %1295 = vmatmul.bf16.gmra.mxu0 %v772
        %v1296 = vpop.f32.mrf.mxu0
        %v1297 = vadd.f32 %v853, %v1296
        %v1298 = vpop.f32.mrf.mxu0
        %v1299 = vadd.f32 %v853, %v1298
        %1300 = vmatmul.bf16.gmra.mxu0 %v773
        %v1301 = vpop.f32.mrf.mxu0
        %v1302 = vadd.f32 %v853, %v1301
        %v1303 = vpop.f32.mrf.mxu0
        %v1304 = vadd.f32 %v853, %v1303
        %1305 = vmatmul.bf16.gmra.mxu0 %v774
        %v1306 = vpop.f32.mrf.mxu0
        %v1307 = vadd.f32 %v853, %v1306
        %v1308 = vpop.f32.mrf.mxu0
        %v1309 = vadd.f32 %v853, %v1308
        %1310 = vmatmul.bf16.gmra.mxu0 %v775
        %v1311 = vpop.f32.mrf.mxu0
        %v1312 = vadd.f32 %v853, %v1311
        %v1313 = vpop.f32.mrf.mxu0
        %v1314 = vadd.f32 %v853, %v1313
        %1315 = vmatmul.bf16.gmra.mxu0 %v776
        %v1316 = vpop.f32.mrf.mxu0
        %v1317 = vadd.f32 %v853, %v1316
        %v1318 = vpop.f32.mrf.mxu0
        %v1319 = vadd.f32 %v853, %v1318
        %1320 = vmatmul.bf16.gmra.mxu0 %v777
        %v1321 = vpop.f32.mrf.mxu0
        %v1322 = vadd.f32 %v853, %v1321
        %v1323 = vpop.f32.mrf.mxu0
        %v1324 = vadd.f32 %v853, %v1323
        %1325 = vmatmul.bf16.gmra.mxu0 %v778
        %v1326 = vpop.f32.mrf.mxu0
        %v1327 = vadd.f32 %v853, %v1326
        %v1328 = vpop.f32.mrf.mxu0
        %v1329 = vadd.f32 %v853, %v1328
        %1330 = vmatmul.bf16.gmra.mxu0 %v779
        %v1331 = vpop.f32.mrf.mxu0
        %v1332 = vadd.f32 %v853, %v1331
        %v1333 = vpop.f32.mrf.mxu0
        %v1334 = vadd.f32 %v853, %v1333
        %1335 = vmatmul.bf16.gmra.mxu0 %v780
        %v1336 = vpop.f32.mrf.mxu0
        %v1337 = vadd.f32 %v853, %v1336
        %v1338 = vpop.f32.mrf.mxu0
        %v1339 = vadd.f32 %v853, %v1338
        %1340 = vmatmul.bf16.gmra.mxu0 %v781
        %v1341 = vpop.f32.mrf.mxu0
        %v1342 = vadd.f32 %v853, %v1341
        %v1343 = vpop.f32.mrf.mxu0
        %v1344 = vadd.f32 %v853, %v1343
        %1345 = vmatmul.bf16.gmra.mxu0 %v782
        %v1346 = vpop.f32.mrf.mxu0
        %v1347 = vadd.f32 %v853, %v1346
        %v1348 = vpop.f32.mrf.mxu0
        %v1349 = vadd.f32 %v853, %v1348
        %1350 = vmatmul.bf16.gmra.mxu0 %v783
        %v1351 = vpop.f32.mrf.mxu0
        %v1352 = vadd.f32 %v853, %v1351
        %v1353 = vpop.f32.mrf.mxu0
        %v1354 = vadd.f32 %v853, %v1353
        %1355 = vmatmul.bf16.gmra.mxu0 %v784
        %v1356 = vpop.f32.mrf.mxu0
        %v1357 = vadd.f32 %v853, %v1356
        %v1358 = vpop.f32.mrf.mxu0
        %v1359 = vadd.f32 %v853, %v1358
        %1360 = vmatmul.bf16.gmra.mxu0 %v785
        %v1361 = vpop.f32.mrf.mxu0
        %v1362 = vadd.f32 %v853, %v1361
        %v1363 = vpop.f32.mrf.mxu0
        %v1364 = vadd.f32 %v853, %v1363
        %1365 = vdwg.mxu0
        %1366 = vmatpush.bf16.msra.mxu0 %v1118
        %1367 = vmatpush.bf16.msra.mxu0 %v1110
        %1368 = vmatpush.bf16.msra.mxu0 %v1102
        %1369 = vmatpush.bf16.msra.mxu0 %v1094
        %1370 = vmatpush.bf16.msra.mxu0 %v1086
        %1371 = vmatpush.bf16.msra.mxu0 %v1078
        %1372 = vmatpush.bf16.msra.mxu0 %v1070
        %1373 = vmatpush.bf16.msra.mxu0 %v1062
        %1374 = vmatmul.bf16.gmra.mxu0 %v770
        %v1375 = vpop.f32.mrf.mxu0
        %v1376 = vadd.f32 %v854, %v1375
        %v1377 = vpop.f32.mrf.mxu0
        %v1378 = vadd.f32 %v854, %v1377
        %1379 = vmatmul.bf16.gmra.mxu0 %v771
        %v1380 = vpop.f32.mrf.mxu0
        %v1381 = vadd.f32 %v854, %v1380
        %v1382 = vpop.f32.mrf.mxu0
        %v1383 = vadd.f32 %v854, %v1382
        %1384 = vmatmul.bf16.gmra.mxu0 %v772
        %v1385 = vpop.f32.mrf.mxu0
        %v1386 = vadd.f32 %v854, %v1385
        %v1387 = vpop.f32.mrf.mxu0
        %v1388 = vadd.f32 %v854, %v1387
        %1389 = vmatmul.bf16.gmra.mxu0 %v773
        %v1390 = vpop.f32.mrf.mxu0
        %v1391 = vadd.f32 %v854, %v1390
        %v1392 = vpop.f32.mrf.mxu0
        %v1393 = vadd.f32 %v854, %v1392
        %1394 = vmatmul.bf16.gmra.mxu0 %v774
        %v1395 = vpop.f32.mrf.mxu0
        %v1396 = vadd.f32 %v854, %v1395
        %v1397 = vpop.f32.mrf.mxu0
        %v1398 = vadd.f32 %v854, %v1397
        %1399 = vmatmul.bf16.gmra.mxu0 %v775
        %v1400 = vpop.f32.mrf.mxu0
        %v1401 = vadd.f32 %v854, %v1400
        %v1402 = vpop.f32.mrf.mxu0
        %v1403 = vadd.f32 %v854, %v1402
        %1404 = vmatmul.bf16.gmra.mxu0 %v776
        %v1405 = vpop.f32.mrf.mxu0
        %v1406 = vadd.f32 %v854, %v1405
        %v1407 = vpop.f32.mrf.mxu0
        %v1408 = vadd.f32 %v854, %v1407
        %1409 = vmatmul.bf16.gmra.mxu0 %v777
        %v1410 = vpop.f32.mrf.mxu0
        %v1411 = vadd.f32 %v854, %v1410
        %v1412 = vpop.f32.mrf.mxu0
        %v1413 = vadd.f32 %v854, %v1412
        %1414 = vmatmul.bf16.gmra.mxu0 %v778
        %v1415 = vpop.f32.mrf.mxu0
        %v1416 = vadd.f32 %v854, %v1415
        %v1417 = vpop.f32.mrf.mxu0
        %v1418 = vadd.f32 %v854, %v1417
        %1419 = vmatmul.bf16.gmra.mxu0 %v779
        %v1420 = vpop.f32.mrf.mxu0
        %v1421 = vadd.f32 %v854, %v1420
        %v1422 = vpop.f32.mrf.mxu0
        %v1423 = vadd.f32 %v854, %v1422
        %1424 = vmatmul.bf16.gmra.mxu0 %v780
        %v1425 = vpop.f32.mrf.mxu0
        %v1426 = vadd.f32 %v854, %v1425
        %v1427 = vpop.f32.mrf.mxu0
        %v1428 = vadd.f32 %v854, %v1427
        %1429 = vmatmul.bf16.gmra.mxu0 %v781
        %v1430 = vpop.f32.mrf.mxu0
        %v1431 = vadd.f32 %v854, %v1430
        %v1432 = vpop.f32.mrf.mxu0
        %v1433 = vadd.f32 %v854, %v1432
        %1434 = vmatmul.bf16.gmra.mxu0 %v782
        %v1435 = vpop.f32.mrf.mxu0
        %v1436 = vadd.f32 %v854, %v1435
        %v1437 = vpop.f32.mrf.mxu0
        %v1438 = vadd.f32 %v854, %v1437
        %1439 = vmatmul.bf16.gmra.mxu0 %v783
        %v1440 = vpop.f32.mrf.mxu0
        %v1441 = vadd.f32 %v854, %v1440
        %v1442 = vpop.f32.mrf.mxu0
        %v1443 = vadd.f32 %v854, %v1442
        %1444 = vmatmul.bf16.gmra.mxu0 %v784
        %v1445 = vpop.f32.mrf.mxu0
        %v1446 = vadd.f32 %v854, %v1445
        %v1447 = vpop.f32.mrf.mxu0
        %v1448 = vadd.f32 %v854, %v1447
        %1449 = vmatmul.bf16.gmra.mxu0 %v785
        %v1450 = vpop.f32.mrf.mxu0
        %v1451 = vadd.f32 %v854, %v1450
        %v1452 = vpop.f32.mrf.mxu0
        %v1453 = vadd.f32 %v854, %v1452
        %1454 = vdwg.mxu0
        %1455 = vmatpush.bf16.msra.mxu0 %v1119
        %1456 = vmatpush.bf16.msra.mxu0 %v1111
        %1457 = vmatpush.bf16.msra.mxu0 %v1103
        %1458 = vmatpush.bf16.msra.mxu0 %v1095
        %1459 = vmatpush.bf16.msra.mxu0 %v1087
        %1460 = vmatpush.bf16.msra.mxu0 %v1079
        %1461 = vmatpush.bf16.msra.mxu0 %v1071
        %1462 = vmatpush.bf16.msra.mxu0 %v1063
        %1463 = vmatmul.bf16.gmra.mxu0 %v770
        %v1464 = vpop.f32.mrf.mxu0
        %v1465 = vadd.f32 %v855, %v1464
        %v1466 = vpop.f32.mrf.mxu0
        %v1467 = vadd.f32 %v855, %v1466
        %1468 = vmatmul.bf16.gmra.mxu0 %v771
        %v1469 = vpop.f32.mrf.mxu0
        %v1470 = vadd.f32 %v855, %v1469
        %v1471 = vpop.f32.mrf.mxu0
        %v1472 = vadd.f32 %v855, %v1471
        %1473 = vmatmul.bf16.gmra.mxu0 %v772
        %v1474 = vpop.f32.mrf.mxu0
        %v1475 = vadd.f32 %v855, %v1474
        %v1476 = vpop.f32.mrf.mxu0
        %v1477 = vadd.f32 %v855, %v1476
        %1478 = vmatmul.bf16.gmra.mxu0 %v773
        %v1479 = vpop.f32.mrf.mxu0
        %v1480 = vadd.f32 %v855, %v1479
        %v1481 = vpop.f32.mrf.mxu0
        %v1482 = vadd.f32 %v855, %v1481
        %1483 = vmatmul.bf16.gmra.mxu0 %v774
        %v1484 = vpop.f32.mrf.mxu0
        %v1485 = vadd.f32 %v855, %v1484
        %v1486 = vpop.f32.mrf.mxu0
        %v1487 = vadd.f32 %v855, %v1486
        %1488 = vmatmul.bf16.gmra.mxu0 %v775
        %v1489 = vpop.f32.mrf.mxu0
        %v1490 = vadd.f32 %v855, %v1489
        %v1491 = vpop.f32.mrf.mxu0
        %v1492 = vadd.f32 %v855, %v1491
        %1493 = vmatmul.bf16.gmra.mxu0 %v776
        %v1494 = vpop.f32.mrf.mxu0
        %v1495 = vadd.f32 %v855, %v1494
        %v1496 = vpop.f32.mrf.mxu0
        %v1497 = vadd.f32 %v855, %v1496
        %1498 = vmatmul.bf16.gmra.mxu0 %v777
        %v1499 = vpop.f32.mrf.mxu0
        %v1500 = vadd.f32 %v855, %v1499
        %v1501 = vpop.f32.mrf.mxu0
        %v1502 = vadd.f32 %v855, %v1501
        %1503 = vmatmul.bf16.gmra.mxu0 %v778
        %v1504 = vpop.f32.mrf.mxu0
        %v1505 = vadd.f32 %v855, %v1504
        %v1506 = vpop.f32.mrf.mxu0
        %v1507 = vadd.f32 %v855, %v1506
        %1508 = vmatmul.bf16.gmra.mxu0 %v779
        %v1509 = vpop.f32.mrf.mxu0
        %v1510 = vadd.f32 %v855, %v1509
        %v1511 = vpop.f32.mrf.mxu0
        %v1512 = vadd.f32 %v855, %v1511
        %1513 = vmatmul.bf16.gmra.mxu0 %v780
        %v1514 = vpop.f32.mrf.mxu0
        %v1515 = vadd.f32 %v855, %v1514
        %v1516 = vpop.f32.mrf.mxu0
        %v1517 = vadd.f32 %v855, %v1516
        %1518 = vmatmul.bf16.gmra.mxu0 %v781
        %v1519 = vpop.f32.mrf.mxu0
        %v1520 = vadd.f32 %v855, %v1519
        %v1521 = vpop.f32.mrf.mxu0
        %v1522 = vadd.f32 %v855, %v1521
        %1523 = vmatmul.bf16.gmra.mxu0 %v782
        %v1524 = vpop.f32.mrf.mxu0
        %v1525 = vadd.f32 %v855, %v1524
        %v1526 = vpop.f32.mrf.mxu0
        %v1527 = vadd.f32 %v855, %v1526
        %1528 = vmatmul.bf16.gmra.mxu0 %v783
        %v1529 = vpop.f32.mrf.mxu0
        %v1530 = vadd.f32 %v855, %v1529
        %v1531 = vpop.f32.mrf.mxu0
        %v1532 = vadd.f32 %v855, %v1531
        %1533 = vmatmul.bf16.gmra.mxu0 %v784
        %v1534 = vpop.f32.mrf.mxu0
        %v1535 = vadd.f32 %v855, %v1534
        %v1536 = vpop.f32.mrf.mxu0
        %v1537 = vadd.f32 %v855, %v1536
        %1538 = vmatmul.bf16.gmra.mxu0 %v785
        %v1539 = vpop.f32.mrf.mxu0
        %v1540 = vadd.f32 %v855, %v1539
        %v1541 = vpop.f32.mrf.mxu0
        %v1542 = vadd.f32 %v855, %v1541
        %1543 = vdwg.mxu0
        %1544 = vmatpush.bf16.msra.mxu0 %v1120
        %1545 = vmatpush.bf16.msra.mxu0 %v1112
        %1546 = vmatpush.bf16.msra.mxu0 %v1104
        %1547 = vmatpush.bf16.msra.mxu0 %v1096
        %1548 = vmatpush.bf16.msra.mxu0 %v1088
        %1549 = vmatpush.bf16.msra.mxu0 %v1080
        %1550 = vmatpush.bf16.msra.mxu0 %v1072
        %1551 = vmatpush.bf16.msra.mxu0 %v1064
        %1552 = vmatmul.bf16.gmra.mxu0 %v770
        %v1553 = vpop.f32.mrf.mxu0
        %v1554 = vadd.f32 %v856, %v1553
        %v1555 = vpop.f32.mrf.mxu0
        %v1556 = vadd.f32 %v856, %v1555
        %1557 = vmatmul.bf16.gmra.mxu0 %v771
        %v1558 = vpop.f32.mrf.mxu0
        %v1559 = vadd.f32 %v856, %v1558
        %v1560 = vpop.f32.mrf.mxu0
        %v1561 = vadd.f32 %v856, %v1560
        %1562 = vmatmul.bf16.gmra.mxu0 %v772
        %v1563 = vpop.f32.mrf.mxu0
        %v1564 = vadd.f32 %v856, %v1563
        %v1565 = vpop.f32.mrf.mxu0
        %v1566 = vadd.f32 %v856, %v1565
        %1567 = vmatmul.bf16.gmra.mxu0 %v773
        %v1568 = vpop.f32.mrf.mxu0
        %v1569 = vadd.f32 %v856, %v1568
        %v1570 = vpop.f32.mrf.mxu0
        %v1571 = vadd.f32 %v856, %v1570
        %1572 = vmatmul.bf16.gmra.mxu0 %v774
        %v1573 = vpop.f32.mrf.mxu0
        %v1574 = vadd.f32 %v856, %v1573
        %v1575 = vpop.f32.mrf.mxu0
        %v1576 = vadd.f32 %v856, %v1575
        %1577 = vmatmul.bf16.gmra.mxu0 %v775
        %v1578 = vpop.f32.mrf.mxu0
        %v1579 = vadd.f32 %v856, %v1578
        %v1580 = vpop.f32.mrf.mxu0
        %v1581 = vadd.f32 %v856, %v1580
        %1582 = vmatmul.bf16.gmra.mxu0 %v776
        %v1583 = vpop.f32.mrf.mxu0
        %v1584 = vadd.f32 %v856, %v1583
        %v1585 = vpop.f32.mrf.mxu0
        %v1586 = vadd.f32 %v856, %v1585
        %1587 = vmatmul.bf16.gmra.mxu0 %v777
        %v1588 = vpop.f32.mrf.mxu0
        %v1589 = vadd.f32 %v856, %v1588
        %v1590 = vpop.f32.mrf.mxu0
        %v1591 = vadd.f32 %v856, %v1590
        %1592 = vmatmul.bf16.gmra.mxu0 %v778
        %v1593 = vpop.f32.mrf.mxu0
        %v1594 = vadd.f32 %v856, %v1593
        %v1595 = vpop.f32.mrf.mxu0
        %v1596 = vadd.f32 %v856, %v1595
        %1597 = vmatmul.bf16.gmra.mxu0 %v779
        %v1598 = vpop.f32.mrf.mxu0
        %v1599 = vadd.f32 %v856, %v1598
        %v1600 = vpop.f32.mrf.mxu0
        %v1601 = vadd.f32 %v856, %v1600
        %1602 = vmatmul.bf16.gmra.mxu0 %v780
        %v1603 = vpop.f32.mrf.mxu0
        %v1604 = vadd.f32 %v856, %v1603
        %v1605 = vpop.f32.mrf.mxu0
        %v1606 = vadd.f32 %v856, %v1605
        %1607 = vmatmul.bf16.gmra.mxu0 %v781
        %v1608 = vpop.f32.mrf.mxu0
        %v1609 = vadd.f32 %v856, %v1608
        %v1610 = vpop.f32.mrf.mxu0
        %v1611 = vadd.f32 %v856, %v1610
        %1612 = vmatmul.bf16.gmra.mxu0 %v782
        %v1613 = vpop.f32.mrf.mxu0
        %v1614 = vadd.f32 %v856, %v1613
        %v1615 = vpop.f32.mrf.mxu0
        %v1616 = vadd.f32 %v856, %v1615
        %1617 = vmatmul.bf16.gmra.mxu0 %v783
        %v1618 = vpop.f32.mrf.mxu0
        %v1619 = vadd.f32 %v856, %v1618
        %v1620 = vpop.f32.mrf.mxu0
        %v1621 = vadd.f32 %v856, %v1620
        %1622 = vmatmul.bf16.gmra.mxu0 %v784
        %v1623 = vpop.f32.mrf.mxu0
        %v1624 = vadd.f32 %v856, %v1623
        %v1625 = vpop.f32.mrf.mxu0
        %v1626 = vadd.f32 %v856, %v1625
        %1627 = vmatmul.bf16.gmra.mxu0 %v785
        %v1628 = vpop.f32.mrf.mxu0
        %v1629 = vadd.f32 %v856, %v1628
        %v1630 = vpop.f32.mrf.mxu0
        %v1631 = vadd.f32 %v856, %v1630
        %1632 = vdwg.mxu0
        %1633 = vmatpush.bf16.msra.mxu0 %v1121
        %1634 = vmatpush.bf16.msra.mxu0 %v1113
        %1635 = vmatpush.bf16.msra.mxu0 %v1105
        %1636 = vmatpush.bf16.msra.mxu0 %v1097
        %1637 = vmatpush.bf16.msra.mxu0 %v1089
        %1638 = vmatpush.bf16.msra.mxu0 %v1081
        %1639 = vmatpush.bf16.msra.mxu0 %v1073
        %1640 = vmatpush.bf16.msra.mxu0 %v1065
        %1641 = vmatmul.bf16.gmra.mxu0 %v770
        %v1642 = vpop.f32.mrf.mxu0
        %v1643 = vadd.f32 %v857, %v1642
        %v1644 = vpop.f32.mrf.mxu0
        %v1645 = vadd.f32 %v857, %v1644
        %1646 = vmatmul.bf16.gmra.mxu0 %v771
        %v1647 = vpop.f32.mrf.mxu0
        %v1648 = vadd.f32 %v857, %v1647
        %v1649 = vpop.f32.mrf.mxu0
        %v1650 = vadd.f32 %v857, %v1649
        %1651 = vmatmul.bf16.gmra.mxu0 %v772
        %v1652 = vpop.f32.mrf.mxu0
        %v1653 = vadd.f32 %v857, %v1652
        %v1654 = vpop.f32.mrf.mxu0
        %v1655 = vadd.f32 %v857, %v1654
        %1656 = vmatmul.bf16.gmra.mxu0 %v773
        %v1657 = vpop.f32.mrf.mxu0
        %v1658 = vadd.f32 %v857, %v1657
        %v1659 = vpop.f32.mrf.mxu0
        %v1660 = vadd.f32 %v857, %v1659
        %1661 = vmatmul.bf16.gmra.mxu0 %v774
        %v1662 = vpop.f32.mrf.mxu0
        %v1663 = vadd.f32 %v857, %v1662
        %v1664 = vpop.f32.mrf.mxu0
        %v1665 = vadd.f32 %v857, %v1664
        %1666 = vmatmul.bf16.gmra.mxu0 %v775
        %v1667 = vpop.f32.mrf.mxu0
        %v1668 = vadd.f32 %v857, %v1667
        %v1669 = vpop.f32.mrf.mxu0
        %v1670 = vadd.f32 %v857, %v1669
        %1671 = vmatmul.bf16.gmra.mxu0 %v776
        %v1672 = vpop.f32.mrf.mxu0
        %v1673 = vadd.f32 %v857, %v1672
        %v1674 = vpop.f32.mrf.mxu0
        %v1675 = vadd.f32 %v857, %v1674
        %1676 = vmatmul.bf16.gmra.mxu0 %v777
        %v1677 = vpop.f32.mrf.mxu0
        %v1678 = vadd.f32 %v857, %v1677
        %v1679 = vpop.f32.mrf.mxu0
        %v1680 = vadd.f32 %v857, %v1679
        %1681 = vmatmul.bf16.gmra.mxu0 %v778
        %v1682 = vpop.f32.mrf.mxu0
        %v1683 = vadd.f32 %v857, %v1682
        %v1684 = vpop.f32.mrf.mxu0
        %v1685 = vadd.f32 %v857, %v1684
        %1686 = vmatmul.bf16.gmra.mxu0 %v779
        %v1687 = vpop.f32.mrf.mxu0
        %v1688 = vadd.f32 %v857, %v1687
        %v1689 = vpop.f32.mrf.mxu0
        %v1690 = vadd.f32 %v857, %v1689
        %1691 = vmatmul.bf16.gmra.mxu0 %v780
        %v1692 = vpop.f32.mrf.mxu0
        %v1693 = vadd.f32 %v857, %v1692
        %v1694 = vpop.f32.mrf.mxu0
        %v1695 = vadd.f32 %v857, %v1694
        %1696 = vmatmul.bf16.gmra.mxu0 %v781
        %v1697 = vpop.f32.mrf.mxu0
        %v1698 = vadd.f32 %v857, %v1697
        %v1699 = vpop.f32.mrf.mxu0
        %v1700 = vadd.f32 %v857, %v1699
        %1701 = vmatmul.bf16.gmra.mxu0 %v782
        %v1702 = vpop.f32.mrf.mxu0
        %v1703 = vadd.f32 %v857, %v1702
        %v1704 = vpop.f32.mrf.mxu0
        %v1705 = vadd.f32 %v857, %v1704
        %1706 = vmatmul.bf16.gmra.mxu0 %v783
        %v1707 = vpop.f32.mrf.mxu0
        %v1708 = vadd.f32 %v857, %v1707
        %v1709 = vpop.f32.mrf.mxu0
        %v1710 = vadd.f32 %v857, %v1709
        %1711 = vmatmul.bf16.gmra.mxu0 %v784
        %v1712 = vpop.f32.mrf.mxu0
        %v1713 = vadd.f32 %v857, %v1712
        %v1714 = vpop.f32.mrf.mxu0
        %v1715 = vadd.f32 %v857, %v1714
        %1716 = vmatmul.bf16.gmra.mxu0 %v785
        %v1717 = vpop.f32.mrf.mxu0
        %v1718 = vadd.f32 %v857, %v1717
        %v1719 = vpop.f32.mrf.mxu0
        %v1720 = vadd.f32 %v857, %v1719
        %1721 = vdwg.mxu0
        %1722 = vmatpush.bf16.msra.mxu0 %v1122
        %1723 = vmatpush.bf16.msra.mxu0 %v1114
        %1724 = vmatpush.bf16.msra.mxu0 %v1106
        %1725 = vmatpush.bf16.msra.mxu0 %v1098
        %1726 = vmatpush.bf16.msra.mxu0 %v1090
        %1727 = vmatpush.bf16.msra.mxu0 %v1082
        %1728 = vmatpush.bf16.msra.mxu0 %v1074
        %1729 = vmatpush.bf16.msra.mxu0 %v1066
        %1730 = vmatmul.bf16.gmra.mxu0 %v770
        %v1731 = vpop.f32.mrf.mxu0
        %v1732 = vadd.f32 %v858, %v1731
        %v1733 = vpop.f32.mrf.mxu0
        %v1734 = vadd.f32 %v858, %v1733
        %1735 = vmatmul.bf16.gmra.mxu0 %v771
        %v1736 = vpop.f32.mrf.mxu0
        %v1737 = vadd.f32 %v858, %v1736
        %v1738 = vpop.f32.mrf.mxu0
        %v1739 = vadd.f32 %v858, %v1738
        %1740 = vmatmul.bf16.gmra.mxu0 %v772
        %v1741 = vpop.f32.mrf.mxu0
        %v1742 = vadd.f32 %v858, %v1741
        %v1743 = vpop.f32.mrf.mxu0
        %v1744 = vadd.f32 %v858, %v1743
        %1745 = vmatmul.bf16.gmra.mxu0 %v773
        %v1746 = vpop.f32.mrf.mxu0
        %v1747 = vadd.f32 %v858, %v1746
        %v1748 = vpop.f32.mrf.mxu0
        %v1749 = vadd.f32 %v858, %v1748
        %1750 = vmatmul.bf16.gmra.mxu0 %v774
        %v1751 = vpop.f32.mrf.mxu0
        %v1752 = vadd.f32 %v858, %v1751
        %v1753 = vpop.f32.mrf.mxu0
        %v1754 = vadd.f32 %v858, %v1753
        %1755 = vmatmul.bf16.gmra.mxu0 %v775
        %v1756 = vpop.f32.mrf.mxu0
        %v1757 = vadd.f32 %v858, %v1756
        %v1758 = vpop.f32.mrf.mxu0
        %v1759 = vadd.f32 %v858, %v1758
        %1760 = vmatmul.bf16.gmra.mxu0 %v776
        %v1761 = vpop.f32.mrf.mxu0
        %v1762 = vadd.f32 %v858, %v1761
        %v1763 = vpop.f32.mrf.mxu0
        %v1764 = vadd.f32 %v858, %v1763
        %1765 = vmatmul.bf16.gmra.mxu0 %v777
        %v1766 = vpop.f32.mrf.mxu0
        %v1767 = vadd.f32 %v858, %v1766
        %v1768 = vpop.f32.mrf.mxu0
        %v1769 = vadd.f32 %v858, %v1768
        %1770 = vmatmul.bf16.gmra.mxu0 %v778
        %v1771 = vpop.f32.mrf.mxu0
        %v1772 = vadd.f32 %v858, %v1771
        %v1773 = vpop.f32.mrf.mxu0
        %v1774 = vadd.f32 %v858, %v1773
        %1775 = vmatmul.bf16.gmra.mxu0 %v779
        %v1776 = vpop.f32.mrf.mxu0
        %v1777 = vadd.f32 %v858, %v1776
        %v1778 = vpop.f32.mrf.mxu0
        %v1779 = vadd.f32 %v858, %v1778
        %1780 = vmatmul.bf16.gmra.mxu0 %v780
        %v1781 = vpop.f32.mrf.mxu0
        %v1782 = vadd.f32 %v858, %v1781
        %v1783 = vpop.f32.mrf.mxu0
        %v1784 = vadd.f32 %v858, %v1783
        %1785 = vmatmul.bf16.gmra.mxu0 %v781
        %v1786 = vpop.f32.mrf.mxu0
        %v1787 = vadd.f32 %v858, %v1786
        %v1788 = vpop.f32.mrf.mxu0
        %v1789 = vadd.f32 %v858, %v1788
        %1790 = vmatmul.bf16.gmra.mxu0 %v782
        %v1791 = vpop.f32.mrf.mxu0
        %v1792 = vadd.f32 %v858, %v1791
        %v1793 = vpop.f32.mrf.mxu0
        %v1794 = vadd.f32 %v858, %v1793
        %1795 = vmatmul.bf16.gmra.mxu0 %v783
        %v1796 = vpop.f32.mrf.mxu0
        %v1797 = vadd.f32 %v858, %v1796
        %v1798 = vpop.f32.mrf.mxu0
        %v1799 = vadd.f32 %v858, %v1798
        %1800 = vmatmul.bf16.gmra.mxu0 %v784
        %v1801 = vpop.f32.mrf.mxu0
        %v1802 = vadd.f32 %v858, %v1801
        %v1803 = vpop.f32.mrf.mxu0
        %v1804 = vadd.f32 %v858, %v1803
        %1805 = vmatmul.bf16.gmra.mxu0 %v785
        %v1806 = vpop.f32.mrf.mxu0
        %v1807 = vadd.f32 %v858, %v1806
        %v1808 = vpop.f32.mrf.mxu0
        %v1809 = vadd.f32 %v858, %v1808
        %1810 = vdwg.mxu0
        %1811 = vmatpush.bf16.msra.mxu0 %v1123
        %1812 = vmatpush.bf16.msra.mxu0 %v1115
        %1813 = vmatpush.bf16.msra.mxu0 %v1107
        %1814 = vmatpush.bf16.msra.mxu0 %v1099
        %1815 = vmatpush.bf16.msra.mxu0 %v1091
        %1816 = vmatpush.bf16.msra.mxu0 %v1083
        %1817 = vmatpush.bf16.msra.mxu0 %v1075
        %1818 = vmatpush.bf16.msra.mxu0 %v1067
        %1819 = vmatmul.bf16.gmra.mxu0 %v770
        %v1820 = vpop.f32.mrf.mxu0
        %v1821 = vadd.f32 %v859, %v1820
        %v1822 = vpop.f32.mrf.mxu0
        %v1823 = vadd.f32 %v859, %v1822
        %1824 = vmatmul.bf16.gmra.mxu0 %v771
        %v1825 = vpop.f32.mrf.mxu0
        %v1826 = vadd.f32 %v859, %v1825
        %v1827 = vpop.f32.mrf.mxu0
        %v1828 = vadd.f32 %v859, %v1827
        %1829 = vmatmul.bf16.gmra.mxu0 %v772
        %v1830 = vpop.f32.mrf.mxu0
        %v1831 = vadd.f32 %v859, %v1830
        %v1832 = vpop.f32.mrf.mxu0
        %v1833 = vadd.f32 %v859, %v1832
        %1834 = vmatmul.bf16.gmra.mxu0 %v773
        %v1835 = vpop.f32.mrf.mxu0
        %v1836 = vadd.f32 %v859, %v1835
        %v1837 = vpop.f32.mrf.mxu0
        %v1838 = vadd.f32 %v859, %v1837
        %1839 = vmatmul.bf16.gmra.mxu0 %v774
        %v1840 = vpop.f32.mrf.mxu0
        %v1841 = vadd.f32 %v859, %v1840
        %v1842 = vpop.f32.mrf.mxu0
        %v1843 = vadd.f32 %v859, %v1842
        %1844 = vmatmul.bf16.gmra.mxu0 %v775
        %v1845 = vpop.f32.mrf.mxu0
        %v1846 = vadd.f32 %v859, %v1845
        %v1847 = vpop.f32.mrf.mxu0
        %v1848 = vadd.f32 %v859, %v1847
        %1849 = vmatmul.bf16.gmra.mxu0 %v776
        %v1850 = vpop.f32.mrf.mxu0
        %v1851 = vadd.f32 %v859, %v1850
        %v1852 = vpop.f32.mrf.mxu0
        %v1853 = vadd.f32 %v859, %v1852
        %1854 = vmatmul.bf16.gmra.mxu0 %v777
        %v1855 = vpop.f32.mrf.mxu0
        %v1856 = vadd.f32 %v859, %v1855
        %v1857 = vpop.f32.mrf.mxu0
        %v1858 = vadd.f32 %v859, %v1857
        %1859 = vmatmul.bf16.gmra.mxu0 %v778
        %v1860 = vpop.f32.mrf.mxu0
        %v1861 = vadd.f32 %v859, %v1860
        %v1862 = vpop.f32.mrf.mxu0
        %v1863 = vadd.f32 %v859, %v1862
        %1864 = vmatmul.bf16.gmra.mxu0 %v779
        %v1865 = vpop.f32.mrf.mxu0
        %v1866 = vadd.f32 %v859, %v1865
        %v1867 = vpop.f32.mrf.mxu0
        %v1868 = vadd.f32 %v859, %v1867
        %1869 = vmatmul.bf16.gmra.mxu0 %v780
        %v1870 = vpop.f32.mrf.mxu0
        %v1871 = vadd.f32 %v859, %v1870
        %v1872 = vpop.f32.mrf.mxu0
        %v1873 = vadd.f32 %v859, %v1872
        %1874 = vmatmul.bf16.gmra.mxu0 %v781
        %v1875 = vpop.f32.mrf.mxu0
        %v1876 = vadd.f32 %v859, %v1875
        %v1877 = vpop.f32.mrf.mxu0
        %v1878 = vadd.f32 %v859, %v1877
        %1879 = vmatmul.bf16.gmra.mxu0 %v782
        %v1880 = vpop.f32.mrf.mxu0
        %v1881 = vadd.f32 %v859, %v1880
        %v1882 = vpop.f32.mrf.mxu0
        %v1883 = vadd.f32 %v859, %v1882
        %1884 = vmatmul.bf16.gmra.mxu0 %v783
        %v1885 = vpop.f32.mrf.mxu0
        %v1886 = vadd.f32 %v859, %v1885
        %v1887 = vpop.f32.mrf.mxu0
        %v1888 = vadd.f32 %v859, %v1887
        %1889 = vmatmul.bf16.gmra.mxu0 %v784
        %v1890 = vpop.f32.mrf.mxu0
        %v1891 = vadd.f32 %v859, %v1890
        %v1892 = vpop.f32.mrf.mxu0
        %v1893 = vadd.f32 %v859, %v1892
        %1894 = vmatmul.bf16.gmra.mxu0 %v785
        %v1895 = vpop.f32.mrf.mxu0
        %v1896 = vadd.f32 %v859, %v1895
        %v1897 = vpop.f32.mrf.mxu0
        %v1898 = vadd.f32 %v859, %v1897
        %1899 = vdwg.mxu0
        %v1900 = vmax.f32 %v1198, 0.0
        %v1901 = vmax.f32 %v1287, 0.0
        %v1902 = vmax.f32 %v1376, 0.0
        %v1903 = vmax.f32 %v1465, 0.0
        %v1904 = vmax.f32 %v1554, 0.0
        %v1905 = vmax.f32 %v1643, 0.0
        %v1906 = vmax.f32 %v1732, 0.0
        %v1907 = vmax.f32 %v1821, 0.0
        %v1908 = vmax.f32 %v1200, 0.0
        %v1909 = vmax.f32 %v1289, 0.0
        %v1910 = vmax.f32 %v1378, 0.0
        %v1911 = vmax.f32 %v1467, 0.0
        %v1912 = vmax.f32 %v1556, 0.0
        %v1913 = vmax.f32 %v1645, 0.0
        %v1914 = vmax.f32 %v1734, 0.0
        %v1915 = vmax.f32 %v1823, 0.0
        %v1916 = vmax.f32 %v1203, 0.0
        %v1917 = vmax.f32 %v1292, 0.0
        %v1918 = vmax.f32 %v1381, 0.0
        %v1919 = vmax.f32 %v1470, 0.0
        %v1920 = vmax.f32 %v1559, 0.0
        %v1921 = vmax.f32 %v1648, 0.0
        %v1922 = vmax.f32 %v1737, 0.0
        %v1923 = vmax.f32 %v1826, 0.0
        %v1924 = vmax.f32 %v1205, 0.0
        %v1925 = vmax.f32 %v1294, 0.0
        %v1926 = vmax.f32 %v1383, 0.0
        %v1927 = vmax.f32 %v1472, 0.0
        %v1928 = vmax.f32 %v1561, 0.0
        %v1929 = vmax.f32 %v1650, 0.0
        %v1930 = vmax.f32 %v1739, 0.0
        %v1931 = vmax.f32 %v1828, 0.0
        %v1932 = vmax.f32 %v1208, 0.0
        %v1933 = vmax.f32 %v1297, 0.0
        %v1934 = vmax.f32 %v1386, 0.0
        %v1935 = vmax.f32 %v1475, 0.0
        %v1936 = vmax.f32 %v1564, 0.0
        %v1937 = vmax.f32 %v1653, 0.0
        %v1938 = vmax.f32 %v1742, 0.0
        %v1939 = vmax.f32 %v1831, 0.0
        %v1940 = vmax.f32 %v1210, 0.0
        %v1941 = vmax.f32 %v1299, 0.0
        %v1942 = vmax.f32 %v1388, 0.0
        %v1943 = vmax.f32 %v1477, 0.0
        %v1944 = vmax.f32 %v1566, 0.0
        %v1945 = vmax.f32 %v1655, 0.0
        %v1946 = vmax.f32 %v1744, 0.0
        %v1947 = vmax.f32 %v1833, 0.0
        %v1948 = vmax.f32 %v1213, 0.0
        %v1949 = vmax.f32 %v1302, 0.0
        %v1950 = vmax.f32 %v1391, 0.0
        %v1951 = vmax.f32 %v1480, 0.0
        %v1952 = vmax.f32 %v1569, 0.0
        %v1953 = vmax.f32 %v1658, 0.0
        %v1954 = vmax.f32 %v1747, 0.0
        %v1955 = vmax.f32 %v1836, 0.0
        %v1956 = vmax.f32 %v1215, 0.0
        %v1957 = vmax.f32 %v1304, 0.0
        %v1958 = vmax.f32 %v1393, 0.0
        %v1959 = vmax.f32 %v1482, 0.0
        %v1960 = vmax.f32 %v1571, 0.0
        %v1961 = vmax.f32 %v1660, 0.0
        %v1962 = vmax.f32 %v1749, 0.0
        %v1963 = vmax.f32 %v1838, 0.0
        %v1964 = vmax.f32 %v1218, 0.0
        %v1965 = vmax.f32 %v1307, 0.0
        %v1966 = vmax.f32 %v1396, 0.0
        %v1967 = vmax.f32 %v1485, 0.0
        %v1968 = vmax.f32 %v1574, 0.0
        %v1969 = vmax.f32 %v1663, 0.0
        %v1970 = vmax.f32 %v1752, 0.0
        %v1971 = vmax.f32 %v1841, 0.0
        %v1972 = vmax.f32 %v1220, 0.0
        %v1973 = vmax.f32 %v1309, 0.0
        %v1974 = vmax.f32 %v1398, 0.0
        %v1975 = vmax.f32 %v1487, 0.0
        %v1976 = vmax.f32 %v1576, 0.0
        %v1977 = vmax.f32 %v1665, 0.0
        %v1978 = vmax.f32 %v1754, 0.0
        %v1979 = vmax.f32 %v1843, 0.0
        %v1980 = vmax.f32 %v1223, 0.0
        %v1981 = vmax.f32 %v1312, 0.0
        %v1982 = vmax.f32 %v1401, 0.0
        %v1983 = vmax.f32 %v1490, 0.0
        %v1984 = vmax.f32 %v1579, 0.0
        %v1985 = vmax.f32 %v1668, 0.0
        %v1986 = vmax.f32 %v1757, 0.0
        %v1987 = vmax.f32 %v1846, 0.0
        %v1988 = vmax.f32 %v1225, 0.0
        %v1989 = vmax.f32 %v1314, 0.0
        %v1990 = vmax.f32 %v1403, 0.0
        %v1991 = vmax.f32 %v1492, 0.0
        %v1992 = vmax.f32 %v1581, 0.0
        %v1993 = vmax.f32 %v1670, 0.0
        %v1994 = vmax.f32 %v1759, 0.0
        %v1995 = vmax.f32 %v1848, 0.0
        %v1996 = vmax.f32 %v1228, 0.0
        %v1997 = vmax.f32 %v1317, 0.0
        %v1998 = vmax.f32 %v1406, 0.0
        %v1999 = vmax.f32 %v1495, 0.0
        %v2000 = vmax.f32 %v1584, 0.0
        %v2001 = vmax.f32 %v1673, 0.0
        %v2002 = vmax.f32 %v1762, 0.0
        %v2003 = vmax.f32 %v1851, 0.0
        %v2004 = vmax.f32 %v1230, 0.0
        %v2005 = vmax.f32 %v1319, 0.0
        %v2006 = vmax.f32 %v1408, 0.0
        %v2007 = vmax.f32 %v1497, 0.0
        %v2008 = vmax.f32 %v1586, 0.0
        %v2009 = vmax.f32 %v1675, 0.0
        %v2010 = vmax.f32 %v1764, 0.0
        %v2011 = vmax.f32 %v1853, 0.0
        %v2012 = vmax.f32 %v1233, 0.0
        %v2013 = vmax.f32 %v1322, 0.0
        %v2014 = vmax.f32 %v1411, 0.0
        %v2015 = vmax.f32 %v1500, 0.0
        %v2016 = vmax.f32 %v1589, 0.0
        %v2017 = vmax.f32 %v1678, 0.0
        %v2018 = vmax.f32 %v1767, 0.0
        %v2019 = vmax.f32 %v1856, 0.0
        %v2020 = vmax.f32 %v1235, 0.0
        %v2021 = vmax.f32 %v1324, 0.0
        %v2022 = vmax.f32 %v1413, 0.0
        %v2023 = vmax.f32 %v1502, 0.0
        %v2024 = vmax.f32 %v1591, 0.0
        %v2025 = vmax.f32 %v1680, 0.0
        %v2026 = vmax.f32 %v1769, 0.0
        %v2027 = vmax.f32 %v1858, 0.0
        %v2028 = vmax.f32 %v1238, 0.0
        %v2029 = vmax.f32 %v1327, 0.0
        %v2030 = vmax.f32 %v1416, 0.0
        %v2031 = vmax.f32 %v1505, 0.0
        %v2032 = vmax.f32 %v1594, 0.0
        %v2033 = vmax.f32 %v1683, 0.0
        %v2034 = vmax.f32 %v1772, 0.0
        %v2035 = vmax.f32 %v1861, 0.0
        %v2036 = vmax.f32 %v1240, 0.0
        %v2037 = vmax.f32 %v1329, 0.0
        %v2038 = vmax.f32 %v1418, 0.0
        %v2039 = vmax.f32 %v1507, 0.0
        %v2040 = vmax.f32 %v1596, 0.0
        %v2041 = vmax.f32 %v1685, 0.0
        %v2042 = vmax.f32 %v1774, 0.0
        %v2043 = vmax.f32 %v1863, 0.0
        %v2044 = vmax.f32 %v1243, 0.0
        %v2045 = vmax.f32 %v1332, 0.0
        %v2046 = vmax.f32 %v1421, 0.0
        %v2047 = vmax.f32 %v1510, 0.0
        %v2048 = vmax.f32 %v1599, 0.0
        %v2049 = vmax.f32 %v1688, 0.0
        %v2050 = vmax.f32 %v1777, 0.0
        %v2051 = vmax.f32 %v1866, 0.0
        %v2052 = vmax.f32 %v1245, 0.0
        %v2053 = vmax.f32 %v1334, 0.0
        %v2054 = vmax.f32 %v1423, 0.0
        %v2055 = vmax.f32 %v1512, 0.0
        %v2056 = vmax.f32 %v1601, 0.0
        %v2057 = vmax.f32 %v1690, 0.0
        %v2058 = vmax.f32 %v1779, 0.0
        %v2059 = vmax.f32 %v1868, 0.0
        %v2060 = vmax.f32 %v1248, 0.0
        %v2061 = vmax.f32 %v1337, 0.0
        %v2062 = vmax.f32 %v1426, 0.0
        %v2063 = vmax.f32 %v1515, 0.0
        %v2064 = vmax.f32 %v1604, 0.0
        %v2065 = vmax.f32 %v1693, 0.0
        %v2066 = vmax.f32 %v1782, 0.0
        %v2067 = vmax.f32 %v1871, 0.0
        %v2068 = vmax.f32 %v1250, 0.0
        %v2069 = vmax.f32 %v1339, 0.0
        %v2070 = vmax.f32 %v1428, 0.0
        %v2071 = vmax.f32 %v1517, 0.0
        %v2072 = vmax.f32 %v1606, 0.0
        %v2073 = vmax.f32 %v1695, 0.0
        %v2074 = vmax.f32 %v1784, 0.0
        %v2075 = vmax.f32 %v1873, 0.0
        %v2076 = vmax.f32 %v1253, 0.0
        %v2077 = vmax.f32 %v1342, 0.0
        %v2078 = vmax.f32 %v1431, 0.0
        %v2079 = vmax.f32 %v1520, 0.0
        %v2080 = vmax.f32 %v1609, 0.0
        %v2081 = vmax.f32 %v1698, 0.0
        %v2082 = vmax.f32 %v1787, 0.0
        %v2083 = vmax.f32 %v1876, 0.0
        %v2084 = vmax.f32 %v1255, 0.0
        %v2085 = vmax.f32 %v1344, 0.0
        %v2086 = vmax.f32 %v1433, 0.0
        %v2087 = vmax.f32 %v1522, 0.0
        %v2088 = vmax.f32 %v1611, 0.0
        %v2089 = vmax.f32 %v1700, 0.0
        %v2090 = vmax.f32 %v1789, 0.0
        %v2091 = vmax.f32 %v1878, 0.0
        %v2092 = vmax.f32 %v1258, 0.0
        %v2093 = vmax.f32 %v1347, 0.0
        %v2094 = vmax.f32 %v1436, 0.0
        %v2095 = vmax.f32 %v1525, 0.0
        %v2096 = vmax.f32 %v1614, 0.0
        %v2097 = vmax.f32 %v1703, 0.0
        %v2098 = vmax.f32 %v1792, 0.0
        %v2099 = vmax.f32 %v1881, 0.0
        %v2100 = vmax.f32 %v1260, 0.0
        %v2101 = vmax.f32 %v1349, 0.0
        %v2102 = vmax.f32 %v1438, 0.0
        %v2103 = vmax.f32 %v1527, 0.0
        %v2104 = vmax.f32 %v1616, 0.0
        %v2105 = vmax.f32 %v1705, 0.0
        %v2106 = vmax.f32 %v1794, 0.0
        %v2107 = vmax.f32 %v1883, 0.0
        %v2108 = vmax.f32 %v1263, 0.0
        %v2109 = vmax.f32 %v1352, 0.0
        %v2110 = vmax.f32 %v1441, 0.0
        %v2111 = vmax.f32 %v1530, 0.0
        %v2112 = vmax.f32 %v1619, 0.0
        %v2113 = vmax.f32 %v1708, 0.0
        %v2114 = vmax.f32 %v1797, 0.0
        %v2115 = vmax.f32 %v1886, 0.0
        %v2116 = vmax.f32 %v1265, 0.0
        %v2117 = vmax.f32 %v1354, 0.0
        %v2118 = vmax.f32 %v1443, 0.0
        %v2119 = vmax.f32 %v1532, 0.0
        %v2120 = vmax.f32 %v1621, 0.0
        %v2121 = vmax.f32 %v1710, 0.0
        %v2122 = vmax.f32 %v1799, 0.0
        %v2123 = vmax.f32 %v1888, 0.0
        %v2124 = vmax.f32 %v1268, 0.0
        %v2125 = vmax.f32 %v1357, 0.0
        %v2126 = vmax.f32 %v1446, 0.0
        %v2127 = vmax.f32 %v1535, 0.0
        %v2128 = vmax.f32 %v1624, 0.0
        %v2129 = vmax.f32 %v1713, 0.0
        %v2130 = vmax.f32 %v1802, 0.0
        %v2131 = vmax.f32 %v1891, 0.0
        %v2132 = vmax.f32 %v1270, 0.0
        %v2133 = vmax.f32 %v1359, 0.0
        %v2134 = vmax.f32 %v1448, 0.0
        %v2135 = vmax.f32 %v1537, 0.0
        %v2136 = vmax.f32 %v1626, 0.0
        %v2137 = vmax.f32 %v1715, 0.0
        %v2138 = vmax.f32 %v1804, 0.0
        %v2139 = vmax.f32 %v1893, 0.0
        %v2140 = vmax.f32 %v1273, 0.0
        %v2141 = vmax.f32 %v1362, 0.0
        %v2142 = vmax.f32 %v1451, 0.0
        %v2143 = vmax.f32 %v1540, 0.0
        %v2144 = vmax.f32 %v1629, 0.0
        %v2145 = vmax.f32 %v1718, 0.0
        %v2146 = vmax.f32 %v1807, 0.0
        %v2147 = vmax.f32 %v1896, 0.0
        %v2148 = vmax.f32 %v1275, 0.0
        %v2149 = vmax.f32 %v1364, 0.0
        %v2150 = vmax.f32 %v1453, 0.0
        %v2151 = vmax.f32 %v1542, 0.0
        %v2152 = vmax.f32 %v1631, 0.0
        %v2153 = vmax.f32 %v1720, 0.0
        %v2154 = vmax.f32 %v1809, 0.0
        %v2155 = vmax.f32 %v1898, 0.0
        %v2156 = vlaneseq
        %v2157 = vshrl.u32 %v2156, 7
        %v2158 = vadd.s32 %v2157, 8
        %v2159 = vadd.s32 %v2157, 16
        %v2160 = vadd.s32 %v2157, 24
        %v2161 = vadd.s32 %v2157, 32
        %v2162 = vadd.s32 %v2157, 40
        %v2163 = vadd.s32 %v2157, 48
        %v2164 = vadd.s32 %v2157, 56
        %v2165 = vadd.s32 %v2157, 64
        %v2166 = vadd.s32 %v2157, 72
        %v2167 = vadd.s32 %v2157, 80
        %v2168 = vadd.s32 %v2157, 88
        %v2169 = vadd.s32 %v2157, 96
        %v2170 = vadd.s32 %v2157, 104
        %v2171 = vadd.s32 %v2157, 112
        %v2172 = vadd.s32 %v2157, 120
        %v2173 = vadd.s32 %v2157, 128
        %v2174 = vadd.s32 %v2157, 136
        %v2175 = vadd.s32 %v2157, 144
        %v2176 = vadd.s32 %v2157, 152
        %v2177 = vadd.s32 %v2157, 160
        %v2178 = vadd.s32 %v2157, 168
        %v2179 = vadd.s32 %v2157, 176
        %v2180 = vadd.s32 %v2157, 184
        %v2181 = vadd.s32 %v2157, 192
        %v2182 = vadd.s32 %v2157, 200
        %v2183 = vadd.s32 %v2157, 208
        %v2184 = vadd.s32 %v2157, 216
        %v2185 = vadd.s32 %v2157, 224
        %v2186 = vadd.s32 %v2157, 232
        %v2187 = vadd.s32 %v2157, 240
        %v2188 = vadd.s32 %v2157, 248
        %s2189 = smul.u32 %s26, 256
        %v2190 = vstv %s2189
        %v2191 = vadd.s32 %v2157, %v2190
        %v2192 = vadd.s32 %v2158, %v2190
        %v2193 = vadd.s32 %v2159, %v2190
        %v2194 = vadd.s32 %v2160, %v2190
        %v2195 = vadd.s32 %v2161, %v2190
        %v2196 = vadd.s32 %v2162, %v2190
        %v2197 = vadd.s32 %v2163, %v2190
        %v2198 = vadd.s32 %v2164, %v2190
        %v2199 = vadd.s32 %v2165, %v2190
        %v2200 = vadd.s32 %v2166, %v2190
        %v2201 = vadd.s32 %v2167, %v2190
        %v2202 = vadd.s32 %v2168, %v2190
        %v2203 = vadd.s32 %v2169, %v2190
        %v2204 = vadd.s32 %v2170, %v2190
        %v2205 = vadd.s32 %v2171, %v2190
        %v2206 = vadd.s32 %v2172, %v2190
        %v2207 = vadd.s32 %v2173, %v2190
        %v2208 = vadd.s32 %v2174, %v2190
        %v2209 = vadd.s32 %v2175, %v2190
        %v2210 = vadd.s32 %v2176, %v2190
        %v2211 = vadd.s32 %v2177, %v2190
        %v2212 = vadd.s32 %v2178, %v2190
        %v2213 = vadd.s32 %v2179, %v2190
        %v2214 = vadd.s32 %v2180, %v2190
        %v2215 = vadd.s32 %v2181, %v2190
        %v2216 = vadd.s32 %v2182, %v2190
        %v2217 = vadd.s32 %v2183, %v2190
        %v2218 = vadd.s32 %v2184, %v2190
        %v2219 = vadd.s32 %v2185, %v2190
        %v2220 = vadd.s32 %v2186, %v2190
        %v2221 = vadd.s32 %v2187, %v2190
        %v2222 = vadd.s32 %v2188, %v2190
        %vm2223 = vcmp.lt.s32.totalorder %v2191, 500
        %vm2224 = vcmp.lt.s32.totalorder %v2192, 500
        %vm2225 = vcmp.lt.s32.totalorder %v2193, 500
        %vm2226 = vcmp.lt.s32.totalorder %v2194, 500
        %vm2227 = vcmp.lt.s32.totalorder %v2195, 500
        %vm2228 = vcmp.lt.s32.totalorder %v2196, 500
        %vm2229 = vcmp.lt.s32.totalorder %v2197, 500
        %vm2230 = vcmp.lt.s32.totalorder %v2198, 500
        %vm2231 = vcmp.lt.s32.totalorder %v2199, 500
        %vm2232 = vcmp.lt.s32.totalorder %v2200, 500
        %vm2233 = vcmp.lt.s32.totalorder %v2201, 500
        %vm2234 = vcmp.lt.s32.totalorder %v2202, 500
        %vm2235 = vcmp.lt.s32.totalorder %v2203, 500
        %vm2236 = vcmp.lt.s32.totalorder %v2204, 500
        %vm2237 = vcmp.lt.s32.totalorder %v2205, 500
        %vm2238 = vcmp.lt.s32.totalorder %v2206, 500
        %vm2239 = vcmp.lt.s32.totalorder %v2207, 500
        %vm2240 = vcmp.lt.s32.totalorder %v2208, 500
        %vm2241 = vcmp.lt.s32.totalorder %v2209, 500
        %vm2242 = vcmp.lt.s32.totalorder %v2210, 500
        %vm2243 = vcmp.lt.s32.totalorder %v2211, 500
        %vm2244 = vcmp.lt.s32.totalorder %v2212, 500
        %vm2245 = vcmp.lt.s32.totalorder %v2213, 500
        %vm2246 = vcmp.lt.s32.totalorder %v2214, 500
        %vm2247 = vcmp.lt.s32.totalorder %v2215, 500
        %vm2248 = vcmp.lt.s32.totalorder %v2216, 500
        %vm2249 = vcmp.lt.s32.totalorder %v2217, 500
        %vm2250 = vcmp.lt.s32.totalorder %v2218, 500
        %vm2251 = vcmp.lt.s32.totalorder %v2219, 500
        %vm2252 = vcmp.lt.s32.totalorder %v2220, 500
        %vm2253 = vcmp.lt.s32.totalorder %v2221, 500
        %vm2254 = vcmp.lt.s32.totalorder %v2222, 500
        %v2255 = vsel %vm2223, 1, 0
        %v2256 = vsel %vm2224, 1, 0
        %v2257 = vsel %vm2225, 1, 0
        %v2258 = vsel %vm2226, 1, 0
        %v2259 = vsel %vm2227, 1, 0
        %v2260 = vsel %vm2228, 1, 0
        %v2261 = vsel %vm2229, 1, 0
        %v2262 = vsel %vm2230, 1, 0
        %v2263 = vsel %vm2231, 1, 0
        %v2264 = vsel %vm2232, 1, 0
        %v2265 = vsel %vm2233, 1, 0
        %v2266 = vsel %vm2234, 1, 0
        %v2267 = vsel %vm2235, 1, 0
        %v2268 = vsel %vm2236, 1, 0
        %v2269 = vsel %vm2237, 1, 0
        %v2270 = vsel %vm2238, 1, 0
        %v2271 = vsel %vm2239, 1, 0
        %v2272 = vsel %vm2240, 1, 0
        %v2273 = vsel %vm2241, 1, 0
        %v2274 = vsel %vm2242, 1, 0
        %v2275 = vsel %vm2243, 1, 0
        %v2276 = vsel %vm2244, 1, 0
        %v2277 = vsel %vm2245, 1, 0
        %v2278 = vsel %vm2246, 1, 0
        %v2279 = vsel %vm2247, 1, 0
        %v2280 = vsel %vm2248, 1, 0
        %v2281 = vsel %vm2249, 1, 0
        %v2282 = vsel %vm2250, 1, 0
        %v2283 = vsel %vm2251, 1, 0
        %v2284 = vsel %vm2252, 1, 0
        %v2285 = vsel %vm2253, 1, 0
        %v2286 = vsel %vm2254, 1, 0
        %vm2287 = vcmp.eq.s32.totalorder %v2255, 1
        %vm2288 = vcmp.eq.s32.totalorder %v2256, 1
        %vm2289 = vcmp.eq.s32.totalorder %v2257, 1
        %vm2290 = vcmp.eq.s32.totalorder %v2258, 1
        %vm2291 = vcmp.eq.s32.totalorder %v2259, 1
        %vm2292 = vcmp.eq.s32.totalorder %v2260, 1
        %vm2293 = vcmp.eq.s32.totalorder %v2261, 1
        %vm2294 = vcmp.eq.s32.totalorder %v2262, 1
        %vm2295 = vcmp.eq.s32.totalorder %v2263, 1
        %vm2296 = vcmp.eq.s32.totalorder %v2264, 1
        %vm2297 = vcmp.eq.s32.totalorder %v2265, 1
        %vm2298 = vcmp.eq.s32.totalorder %v2266, 1
        %vm2299 = vcmp.eq.s32.totalorder %v2267, 1
        %vm2300 = vcmp.eq.s32.totalorder %v2268, 1
        %vm2301 = vcmp.eq.s32.totalorder %v2269, 1
        %vm2302 = vcmp.eq.s32.totalorder %v2270, 1
        %vm2303 = vcmp.eq.s32.totalorder %v2271, 1
        %vm2304 = vcmp.eq.s32.totalorder %v2272, 1
        %vm2305 = vcmp.eq.s32.totalorder %v2273, 1
        %vm2306 = vcmp.eq.s32.totalorder %v2274, 1
        %vm2307 = vcmp.eq.s32.totalorder %v2275, 1
        %vm2308 = vcmp.eq.s32.totalorder %v2276, 1
        %vm2309 = vcmp.eq.s32.totalorder %v2277, 1
        %vm2310 = vcmp.eq.s32.totalorder %v2278, 1
        %vm2311 = vcmp.eq.s32.totalorder %v2279, 1
        %vm2312 = vcmp.eq.s32.totalorder %v2280, 1
        %vm2313 = vcmp.eq.s32.totalorder %v2281, 1
        %vm2314 = vcmp.eq.s32.totalorder %v2282, 1
        %vm2315 = vcmp.eq.s32.totalorder %v2283, 1
        %vm2316 = vcmp.eq.s32.totalorder %v2284, 1
        %vm2317 = vcmp.eq.s32.totalorder %v2285, 1
        %vm2318 = vcmp.eq.s32.totalorder %v2286, 1
        %v2319 = vsel %vm2287, %v1900, -inf
        %v2320 = vsel %vm2287, %v1901, -inf
        %v2321 = vsel %vm2287, %v1902, -inf
        %v2322 = vsel %vm2287, %v1903, -inf
        %v2323 = vsel %vm2287, %v1904, -inf
        %v2324 = vsel %vm2287, %v1905, -inf
        %v2325 = vsel %vm2287, %v1906, -inf
        %v2326 = vsel %vm2287, %v1907, -inf
        %v2327 = vsel %vm2288, %v1908, -inf
        %v2328 = vsel %vm2288, %v1909, -inf
        %v2329 = vsel %vm2288, %v1910, -inf
        %v2330 = vsel %vm2288, %v1911, -inf
        %v2331 = vsel %vm2288, %v1912, -inf
        %v2332 = vsel %vm2288, %v1913, -inf
        %v2333 = vsel %vm2288, %v1914, -inf
        %v2334 = vsel %vm2288, %v1915, -inf
        %v2335 = vsel %vm2289, %v1916, -inf
        %v2336 = vsel %vm2289, %v1917, -inf
        %v2337 = vsel %vm2289, %v1918, -inf
        %v2338 = vsel %vm2289, %v1919, -inf
        %v2339 = vsel %vm2289, %v1920, -inf
        %v2340 = vsel %vm2289, %v1921, -inf
        %v2341 = vsel %vm2289, %v1922, -inf
        %v2342 = vsel %vm2289, %v1923, -inf
        %v2343 = vsel %vm2290, %v1924, -inf
        %v2344 = vsel %vm2290, %v1925, -inf
        %v2345 = vsel %vm2290, %v1926, -inf
        %v2346 = vsel %vm2290, %v1927, -inf
        %v2347 = vsel %vm2290, %v1928, -inf
        %v2348 = vsel %vm2290, %v1929, -inf
        %v2349 = vsel %vm2290, %v1930, -inf
        %v2350 = vsel %vm2290, %v1931, -inf
        %v2351 = vsel %vm2291, %v1932, -inf
        %v2352 = vsel %vm2291, %v1933, -inf
        %v2353 = vsel %vm2291, %v1934, -inf
        %v2354 = vsel %vm2291, %v1935, -inf
        %v2355 = vsel %vm2291, %v1936, -inf
        %v2356 = vsel %vm2291, %v1937, -inf
        %v2357 = vsel %vm2291, %v1938, -inf
        %v2358 = vsel %vm2291, %v1939, -inf
        %v2359 = vsel %vm2292, %v1940, -inf
        %v2360 = vsel %vm2292, %v1941, -inf
        %v2361 = vsel %vm2292, %v1942, -inf
        %v2362 = vsel %vm2292, %v1943, -inf
        %v2363 = vsel %vm2292, %v1944, -inf
        %v2364 = vsel %vm2292, %v1945, -inf
        %v2365 = vsel %vm2292, %v1946, -inf
        %v2366 = vsel %vm2292, %v1947, -inf
        %v2367 = vsel %vm2293, %v1948, -inf
        %v2368 = vsel %vm2293, %v1949, -inf
        %v2369 = vsel %vm2293, %v1950, -inf
        %v2370 = vsel %vm2293, %v1951, -inf
        %v2371 = vsel %vm2293, %v1952, -inf
        %v2372 = vsel %vm2293, %v1953, -inf
        %v2373 = vsel %vm2293, %v1954, -inf
        %v2374 = vsel %vm2293, %v1955, -inf
        %v2375 = vsel %vm2294, %v1956, -inf
        %v2376 = vsel %vm2294, %v1957, -inf
        %v2377 = vsel %vm2294, %v1958, -inf
        %v2378 = vsel %vm2294, %v1959, -inf
        %v2379 = vsel %vm2294, %v1960, -inf
        %v2380 = vsel %vm2294, %v1961, -inf
        %v2381 = vsel %vm2294, %v1962, -inf
        %v2382 = vsel %vm2294, %v1963, -inf
        %v2383 = vsel %vm2295, %v1964, -inf
        %v2384 = vsel %vm2295, %v1965, -inf
        %v2385 = vsel %vm2295, %v1966, -inf
        %v2386 = vsel %vm2295, %v1967, -inf
        %v2387 = vsel %vm2295, %v1968, -inf
        %v2388 = vsel %vm2295, %v1969, -inf
        %v2389 = vsel %vm2295, %v1970, -inf
        %v2390 = vsel %vm2295, %v1971, -inf
        %v2391 = vsel %vm2296, %v1972, -inf
        %v2392 = vsel %vm2296, %v1973, -inf
        %v2393 = vsel %vm2296, %v1974, -inf
        %v2394 = vsel %vm2296, %v1975, -inf
        %v2395 = vsel %vm2296, %v1976, -inf
        %v2396 = vsel %vm2296, %v1977, -inf
        %v2397 = vsel %vm2296, %v1978, -inf
        %v2398 = vsel %vm2296, %v1979, -inf
        %v2399 = vsel %vm2297, %v1980, -inf
        %v2400 = vsel %vm2297, %v1981, -inf
        %v2401 = vsel %vm2297, %v1982, -inf
        %v2402 = vsel %vm2297, %v1983, -inf
        %v2403 = vsel %vm2297, %v1984, -inf
        %v2404 = vsel %vm2297, %v1985, -inf
        %v2405 = vsel %vm2297, %v1986, -inf
        %v2406 = vsel %vm2297, %v1987, -inf
        %v2407 = vsel %vm2298, %v1988, -inf
        %v2408 = vsel %vm2298, %v1989, -inf
        %v2409 = vsel %vm2298, %v1990, -inf
        %v2410 = vsel %vm2298, %v1991, -inf
        %v2411 = vsel %vm2298, %v1992, -inf
        %v2412 = vsel %vm2298, %v1993, -inf
        %v2413 = vsel %vm2298, %v1994, -inf
        %v2414 = vsel %vm2298, %v1995, -inf
        %v2415 = vsel %vm2299, %v1996, -inf
        %v2416 = vsel %vm2299, %v1997, -inf
        %v2417 = vsel %vm2299, %v1998, -inf
        %v2418 = vsel %vm2299, %v1999, -inf
        %v2419 = vsel %vm2299, %v2000, -inf
        %v2420 = vsel %vm2299, %v2001, -inf
        %v2421 = vsel %vm2299, %v2002, -inf
        %v2422 = vsel %vm2299, %v2003, -inf
        %v2423 = vsel %vm2300, %v2004, -inf
        %v2424 = vsel %vm2300, %v2005, -inf
        %v2425 = vsel %vm2300, %v2006, -inf
        %v2426 = vsel %vm2300, %v2007, -inf
        %v2427 = vsel %vm2300, %v2008, -inf
        %v2428 = vsel %vm2300, %v2009, -inf
        %v2429 = vsel %vm2300, %v2010, -inf
        %v2430 = vsel %vm2300, %v2011, -inf
        %v2431 = vsel %vm2301, %v2012, -inf
        %v2432 = vsel %vm2301, %v2013, -inf
        %v2433 = vsel %vm2301, %v2014, -inf
        %v2434 = vsel %vm2301, %v2015, -inf
        %v2435 = vsel %vm2301, %v2016, -inf
        %v2436 = vsel %vm2301, %v2017, -inf
        %v2437 = vsel %vm2301, %v2018, -inf
        %v2438 = vsel %vm2301, %v2019, -inf
        %v2439 = vsel %vm2302, %v2020, -inf
        %v2440 = vsel %vm2302, %v2021, -inf
        %v2441 = vsel %vm2302, %v2022, -inf
        %v2442 = vsel %vm2302, %v2023, -inf
        %v2443 = vsel %vm2302, %v2024, -inf
        %v2444 = vsel %vm2302, %v2025, -inf
        %v2445 = vsel %vm2302, %v2026, -inf
        %v2446 = vsel %vm2302, %v2027, -inf
        %v2447 = vsel %vm2303, %v2028, -inf
        %v2448 = vsel %vm2303, %v2029, -inf
        %v2449 = vsel %vm2303, %v2030, -inf
        %v2450 = vsel %vm2303, %v2031, -inf
        %v2451 = vsel %vm2303, %v2032, -inf
        %v2452 = vsel %vm2303, %v2033, -inf
        %v2453 = vsel %vm2303, %v2034, -inf
        %v2454 = vsel %vm2303, %v2035, -inf
        %v2455 = vsel %vm2304, %v2036, -inf
        %v2456 = vsel %vm2304, %v2037, -inf
        %v2457 = vsel %vm2304, %v2038, -inf
        %v2458 = vsel %vm2304, %v2039, -inf
        %v2459 = vsel %vm2304, %v2040, -inf
        %v2460 = vsel %vm2304, %v2041, -inf
        %v2461 = vsel %vm2304, %v2042, -inf
        %v2462 = vsel %vm2304, %v2043, -inf
        %v2463 = vsel %vm2305, %v2044, -inf
        %v2464 = vsel %vm2305, %v2045, -inf
        %v2465 = vsel %vm2305, %v2046, -inf
        %v2466 = vsel %vm2305, %v2047, -inf
        %v2467 = vsel %vm2305, %v2048, -inf
        %v2468 = vsel %vm2305, %v2049, -inf
        %v2469 = vsel %vm2305, %v2050, -inf
        %v2470 = vsel %vm2305, %v2051, -inf
        %v2471 = vsel %vm2306, %v2052, -inf
        %v2472 = vsel %vm2306, %v2053, -inf
        %v2473 = vsel %vm2306, %v2054, -inf
        %v2474 = vsel %vm2306, %v2055, -inf
        %v2475 = vsel %vm2306, %v2056, -inf
        %v2476 = vsel %vm2306, %v2057, -inf
        %v2477 = vsel %vm2306, %v2058, -inf
        %v2478 = vsel %vm2306, %v2059, -inf
        %v2479 = vsel %vm2307, %v2060, -inf
        %v2480 = vsel %vm2307, %v2061, -inf
        %v2481 = vsel %vm2307, %v2062, -inf
        %v2482 = vsel %vm2307, %v2063, -inf
        %v2483 = vsel %vm2307, %v2064, -inf
        %v2484 = vsel %vm2307, %v2065, -inf
        %v2485 = vsel %vm2307, %v2066, -inf
        %v2486 = vsel %vm2307, %v2067, -inf
        %v2487 = vsel %vm2308, %v2068, -inf
        %v2488 = vsel %vm2308, %v2069, -inf
        %v2489 = vsel %vm2308, %v2070, -inf
        %v2490 = vsel %vm2308, %v2071, -inf
        %v2491 = vsel %vm2308, %v2072, -inf
        %v2492 = vsel %vm2308, %v2073, -inf
        %v2493 = vsel %vm2308, %v2074, -inf
        %v2494 = vsel %vm2308, %v2075, -inf
        %v2495 = vsel %vm2309, %v2076, -inf
        %v2496 = vsel %vm2309, %v2077, -inf
        %v2497 = vsel %vm2309, %v2078, -inf
        %v2498 = vsel %vm2309, %v2079, -inf
        %v2499 = vsel %vm2309, %v2080, -inf
        %v2500 = vsel %vm2309, %v2081, -inf
        %v2501 = vsel %vm2309, %v2082, -inf
        %v2502 = vsel %vm2309, %v2083, -inf
        %v2503 = vsel %vm2310, %v2084, -inf
        %v2504 = vsel %vm2310, %v2085, -inf
        %v2505 = vsel %vm2310, %v2086, -inf
        %v2506 = vsel %vm2310, %v2087, -inf
        %v2507 = vsel %vm2310, %v2088, -inf
        %v2508 = vsel %vm2310, %v2089, -inf
        %v2509 = vsel %vm2310, %v2090, -inf
        %v2510 = vsel %vm2310, %v2091, -inf
        %v2511 = vsel %vm2311, %v2092, -inf
        %v2512 = vsel %vm2311, %v2093, -inf
        %v2513 = vsel %vm2311, %v2094, -inf
        %v2514 = vsel %vm2311, %v2095, -inf
        %v2515 = vsel %vm2311, %v2096, -inf
        %v2516 = vsel %vm2311, %v2097, -inf
        %v2517 = vsel %vm2311, %v2098, -inf
        %v2518 = vsel %vm2311, %v2099, -inf
        %v2519 = vsel %vm2312, %v2100, -inf
        %v2520 = vsel %vm2312, %v2101, -inf
        %v2521 = vsel %vm2312, %v2102, -inf
        %v2522 = vsel %vm2312, %v2103, -inf
        %v2523 = vsel %vm2312, %v2104, -inf
        %v2524 = vsel %vm2312, %v2105, -inf
        %v2525 = vsel %vm2312, %v2106, -inf
        %v2526 = vsel %vm2312, %v2107, -inf
        %v2527 = vsel %vm2313, %v2108, -inf
        %v2528 = vsel %vm2313, %v2109, -inf
        %v2529 = vsel %vm2313, %v2110, -inf
        %v2530 = vsel %vm2313, %v2111, -inf
        %v2531 = vsel %vm2313, %v2112, -inf
        %v2532 = vsel %vm2313, %v2113, -inf
        %v2533 = vsel %vm2313, %v2114, -inf
        %v2534 = vsel %vm2313, %v2115, -inf
        %v2535 = vsel %vm2314, %v2116, -inf
        %v2536 = vsel %vm2314, %v2117, -inf
        %v2537 = vsel %vm2314, %v2118, -inf
        %v2538 = vsel %vm2314, %v2119, -inf
        %v2539 = vsel %vm2314, %v2120, -inf
        %v2540 = vsel %vm2314, %v2121, -inf
        %v2541 = vsel %vm2314, %v2122, -inf
        %v2542 = vsel %vm2314, %v2123, -inf
        %v2543 = vsel %vm2315, %v2124, -inf
        %v2544 = vsel %vm2315, %v2125, -inf
        %v2545 = vsel %vm2315, %v2126, -inf
        %v2546 = vsel %vm2315, %v2127, -inf
        %v2547 = vsel %vm2315, %v2128, -inf
        %v2548 = vsel %vm2315, %v2129, -inf
        %v2549 = vsel %vm2315, %v2130, -inf
        %v2550 = vsel %vm2315, %v2131, -inf
        %v2551 = vsel %vm2316, %v2132, -inf
        %v2552 = vsel %vm2316, %v2133, -inf
        %v2553 = vsel %vm2316, %v2134, -inf
        %v2554 = vsel %vm2316, %v2135, -inf
        %v2555 = vsel %vm2316, %v2136, -inf
        %v2556 = vsel %vm2316, %v2137, -inf
        %v2557 = vsel %vm2316, %v2138, -inf
        %v2558 = vsel %vm2316, %v2139, -inf
        %v2559 = vsel %vm2317, %v2140, -inf
        %v2560 = vsel %vm2317, %v2141, -inf
        %v2561 = vsel %vm2317, %v2142, -inf
        %v2562 = vsel %vm2317, %v2143, -inf
        %v2563 = vsel %vm2317, %v2144, -inf
        %v2564 = vsel %vm2317, %v2145, -inf
        %v2565 = vsel %vm2317, %v2146, -inf
        %v2566 = vsel %vm2317, %v2147, -inf
        %v2567 = vsel %vm2318, %v2148, -inf
        %v2568 = vsel %vm2318, %v2149, -inf
        %v2569 = vsel %vm2318, %v2150, -inf
        %v2570 = vsel %vm2318, %v2151, -inf
        %v2571 = vsel %vm2318, %v2152, -inf
        %v2572 = vsel %vm2318, %v2153, -inf
        %v2573 = vsel %vm2318, %v2154, -inf
        %v2574 = vsel %vm2318, %v2155, -inf
        %v2575 = vmax.f32 %v2319, %v2327
        %v2576 = vmax.f32 %v2575, %v2335
        %v2577 = vmax.f32 %v2576, %v2343
        %v2578 = vmax.f32 %v2577, %v2351
        %v2579 = vmax.f32 %v2578, %v2359
        %v2580 = vmax.f32 %v2579, %v2367
        %v2581 = vmax.f32 %v2580, %v2375
        %v2582 = vmax.f32 %v2581, %v2383
        %v2583 = vmax.f32 %v2582, %v2391
        %v2584 = vmax.f32 %v2583, %v2399
        %v2585 = vmax.f32 %v2584, %v2407
        %v2586 = vmax.f32 %v2585, %v2415
        %v2587 = vmax.f32 %v2586, %v2423
        %v2588 = vmax.f32 %v2587, %v2431
        %v2589 = vmax.f32 %v2588, %v2439
        %v2590 = vmax.f32 %v2589, %v2447
        %v2591 = vmax.f32 %v2590, %v2455
        %v2592 = vmax.f32 %v2591, %v2463
        %v2593 = vmax.f32 %v2592, %v2471
        %v2594 = vmax.f32 %v2593, %v2479
        %v2595 = vmax.f32 %v2594, %v2487
        %v2596 = vmax.f32 %v2595, %v2495
        %v2597 = vmax.f32 %v2596, %v2503
        %v2598 = vmax.f32 %v2597, %v2511
        %v2599 = vmax.f32 %v2598, %v2519
        %v2600 = vmax.f32 %v2599, %v2527
        %v2601 = vmax.f32 %v2600, %v2535
        %v2602 = vmax.f32 %v2601, %v2543
        %v2603 = vmax.f32 %v2602, %v2551
        %v2604 = vmax.f32 %v2603, %v2559
        %v2605 = vmax.f32 %v2604, %v2567
        %v2606 = vmax.f32 %v2320, %v2328
        %v2607 = vmax.f32 %v2606, %v2336
        %v2608 = vmax.f32 %v2607, %v2344
        %v2609 = vmax.f32 %v2608, %v2352
        %v2610 = vmax.f32 %v2609, %v2360
        %v2611 = vmax.f32 %v2610, %v2368
        %v2612 = vmax.f32 %v2611, %v2376
        %v2613 = vmax.f32 %v2612, %v2384
        %v2614 = vmax.f32 %v2613, %v2392
        %v2615 = vmax.f32 %v2614, %v2400
        %v2616 = vmax.f32 %v2615, %v2408
        %v2617 = vmax.f32 %v2616, %v2416
        %v2618 = vmax.f32 %v2617, %v2424
        %v2619 = vmax.f32 %v2618, %v2432
        %v2620 = vmax.f32 %v2619, %v2440
        %v2621 = vmax.f32 %v2620, %v2448
        %v2622 = vmax.f32 %v2621, %v2456
        %v2623 = vmax.f32 %v2622, %v2464
        %v2624 = vmax.f32 %v2623, %v2472
        %v2625 = vmax.f32 %v2624, %v2480
        %v2626 = vmax.f32 %v2625, %v2488
        %v2627 = vmax.f32 %v2626, %v2496
        %v2628 = vmax.f32 %v2627, %v2504
        %v2629 = vmax.f32 %v2628, %v2512
        %v2630 = vmax.f32 %v2629, %v2520
        %v2631 = vmax.f32 %v2630, %v2528
        %v2632 = vmax.f32 %v2631, %v2536
        %v2633 = vmax.f32 %v2632, %v2544
        %v2634 = vmax.f32 %v2633, %v2552
        %v2635 = vmax.f32 %v2634, %v2560
        %v2636 = vmax.f32 %v2635, %v2568
        %v2637 = vmax.f32 %v2321, %v2329
        %v2638 = vmax.f32 %v2637, %v2337
        %v2639 = vmax.f32 %v2638, %v2345
        %v2640 = vmax.f32 %v2639, %v2353
        %v2641 = vmax.f32 %v2640, %v2361
        %v2642 = vmax.f32 %v2641, %v2369
        %v2643 = vmax.f32 %v2642, %v2377
        %v2644 = vmax.f32 %v2643, %v2385
        %v2645 = vmax.f32 %v2644, %v2393
        %v2646 = vmax.f32 %v2645, %v2401
        %v2647 = vmax.f32 %v2646, %v2409
        %v2648 = vmax.f32 %v2647, %v2417
        %v2649 = vmax.f32 %v2648, %v2425
        %v2650 = vmax.f32 %v2649, %v2433
        %v2651 = vmax.f32 %v2650, %v2441
        %v2652 = vmax.f32 %v2651, %v2449
        %v2653 = vmax.f32 %v2652, %v2457
        %v2654 = vmax.f32 %v2653, %v2465
        %v2655 = vmax.f32 %v2654, %v2473
        %v2656 = vmax.f32 %v2655, %v2481
        %v2657 = vmax.f32 %v2656, %v2489
        %v2658 = vmax.f32 %v2657, %v2497
        %v2659 = vmax.f32 %v2658, %v2505
        %v2660 = vmax.f32 %v2659, %v2513
        %v2661 = vmax.f32 %v2660, %v2521
        %v2662 = vmax.f32 %v2661, %v2529
        %v2663 = vmax.f32 %v2662, %v2537
        %v2664 = vmax.f32 %v2663, %v2545
        %v2665 = vmax.f32 %v2664, %v2553
        %v2666 = vmax.f32 %v2665, %v2561
        %v2667 = vmax.f32 %v2666, %v2569
        %v2668 = vmax.f32 %v2322, %v2330
        %v2669 = vmax.f32 %v2668, %v2338
        %v2670 = vmax.f32 %v2669, %v2346
        %v2671 = vmax.f32 %v2670, %v2354
        %v2672 = vmax.f32 %v2671, %v2362
        %v2673 = vmax.f32 %v2672, %v2370
        %v2674 = vmax.f32 %v2673, %v2378
        %v2675 = vmax.f32 %v2674, %v2386
        %v2676 = vmax.f32 %v2675, %v2394
        %v2677 = vmax.f32 %v2676, %v2402
        %v2678 = vmax.f32 %v2677, %v2410
        %v2679 = vmax.f32 %v2678, %v2418
        %v2680 = vmax.f32 %v2679, %v2426
        %v2681 = vmax.f32 %v2680, %v2434
        %v2682 = vmax.f32 %v2681, %v2442
        %v2683 = vmax.f32 %v2682, %v2450
        %v2684 = vmax.f32 %v2683, %v2458
        %v2685 = vmax.f32 %v2684, %v2466
        %v2686 = vmax.f32 %v2685, %v2474
        %v2687 = vmax.f32 %v2686, %v2482
        %v2688 = vmax.f32 %v2687, %v2490
        %v2689 = vmax.f32 %v2688, %v2498
        %v2690 = vmax.f32 %v2689, %v2506
        %v2691 = vmax.f32 %v2690, %v2514
        %v2692 = vmax.f32 %v2691, %v2522
        %v2693 = vmax.f32 %v2692, %v2530
        %v2694 = vmax.f32 %v2693, %v2538
        %v2695 = vmax.f32 %v2694, %v2546
        %v2696 = vmax.f32 %v2695, %v2554
        %v2697 = vmax.f32 %v2696, %v2562
        %v2698 = vmax.f32 %v2697, %v2570
        %v2699 = vmax.f32 %v2323, %v2331
        %v2700 = vmax.f32 %v2699, %v2339
        %v2701 = vmax.f32 %v2700, %v2347
        %v2702 = vmax.f32 %v2701, %v2355
        %v2703 = vmax.f32 %v2702, %v2363
        %v2704 = vmax.f32 %v2703, %v2371
        %v2705 = vmax.f32 %v2704, %v2379
        %v2706 = vmax.f32 %v2705, %v2387
        %v2707 = vmax.f32 %v2706, %v2395
        %v2708 = vmax.f32 %v2707, %v2403
        %v2709 = vmax.f32 %v2708, %v2411
        %v2710 = vmax.f32 %v2709, %v2419
        %v2711 = vmax.f32 %v2710, %v2427
        %v2712 = vmax.f32 %v2711, %v2435
        %v2713 = vmax.f32 %v2712, %v2443
        %v2714 = vmax.f32 %v2713, %v2451
        %v2715 = vmax.f32 %v2714, %v2459
        %v2716 = vmax.f32 %v2715, %v2467
        %v2717 = vmax.f32 %v2716, %v2475
        %v2718 = vmax.f32 %v2717, %v2483
        %v2719 = vmax.f32 %v2718, %v2491
        %v2720 = vmax.f32 %v2719, %v2499
        %v2721 = vmax.f32 %v2720, %v2507
        %v2722 = vmax.f32 %v2721, %v2515
        %v2723 = vmax.f32 %v2722, %v2523
        %v2724 = vmax.f32 %v2723, %v2531
        %v2725 = vmax.f32 %v2724, %v2539
        %v2726 = vmax.f32 %v2725, %v2547
        %v2727 = vmax.f32 %v2726, %v2555
        %v2728 = vmax.f32 %v2727, %v2563
        %v2729 = vmax.f32 %v2728, %v2571
        %v2730 = vmax.f32 %v2324, %v2332
        %v2731 = vmax.f32 %v2730, %v2340
        %v2732 = vmax.f32 %v2731, %v2348
        %v2733 = vmax.f32 %v2732, %v2356
        %v2734 = vmax.f32 %v2733, %v2364
        %v2735 = vmax.f32 %v2734, %v2372
        %v2736 = vmax.f32 %v2735, %v2380
        %v2737 = vmax.f32 %v2736, %v2388
        %v2738 = vmax.f32 %v2737, %v2396
        %v2739 = vmax.f32 %v2738, %v2404
        %v2740 = vmax.f32 %v2739, %v2412
        %v2741 = vmax.f32 %v2740, %v2420
        %v2742 = vmax.f32 %v2741, %v2428
        %v2743 = vmax.f32 %v2742, %v2436
        %v2744 = vmax.f32 %v2743, %v2444
        %v2745 = vmax.f32 %v2744, %v2452
        %v2746 = vmax.f32 %v2745, %v2460
        %v2747 = vmax.f32 %v2746, %v2468
        %v2748 = vmax.f32 %v2747, %v2476
        %v2749 = vmax.f32 %v2748, %v2484
        %v2750 = vmax.f32 %v2749, %v2492
        %v2751 = vmax.f32 %v2750, %v2500
        %v2752 = vmax.f32 %v2751, %v2508
        %v2753 = vmax.f32 %v2752, %v2516
        %v2754 = vmax.f32 %v2753, %v2524
        %v2755 = vmax.f32 %v2754, %v2532
        %v2756 = vmax.f32 %v2755, %v2540
        %v2757 = vmax.f32 %v2756, %v2548
        %v2758 = vmax.f32 %v2757, %v2556
        %v2759 = vmax.f32 %v2758, %v2564
        %v2760 = vmax.f32 %v2759, %v2572
        %v2761 = vmax.f32 %v2325, %v2333
        %v2762 = vmax.f32 %v2761, %v2341
        %v2763 = vmax.f32 %v2762, %v2349
        %v2764 = vmax.f32 %v2763, %v2357
        %v2765 = vmax.f32 %v2764, %v2365
        %v2766 = vmax.f32 %v2765, %v2373
        %v2767 = vmax.f32 %v2766, %v2381
        %v2768 = vmax.f32 %v2767, %v2389
        %v2769 = vmax.f32 %v2768, %v2397
        %v2770 = vmax.f32 %v2769, %v2405
        %v2771 = vmax.f32 %v2770, %v2413
        %v2772 = vmax.f32 %v2771, %v2421
        %v2773 = vmax.f32 %v2772, %v2429
        %v2774 = vmax.f32 %v2773, %v2437
        %v2775 = vmax.f32 %v2774, %v2445
        %v2776 = vmax.f32 %v2775, %v2453
        %v2777 = vmax.f32 %v2776, %v2461
        %v2778 = vmax.f32 %v2777, %v2469
        %v2779 = vmax.f32 %v2778, %v2477
        %v2780 = vmax.f32 %v2779, %v2485
        %v2781 = vmax.f32 %v2780, %v2493
        %v2782 = vmax.f32 %v2781, %v2501
        %v2783 = vmax.f32 %v2782, %v2509
        %v2784 = vmax.f32 %v2783, %v2517
        %v2785 = vmax.f32 %v2784, %v2525
        %v2786 = vmax.f32 %v2785, %v2533
        %v2787 = vmax.f32 %v2786, %v2541
        %v2788 = vmax.f32 %v2787, %v2549
        %v2789 = vmax.f32 %v2788, %v2557
        %v2790 = vmax.f32 %v2789, %v2565
        %v2791 = vmax.f32 %v2790, %v2573
        %v2792 = vmax.f32 %v2326, %v2334
        %v2793 = vmax.f32 %v2792, %v2342
        %v2794 = vmax.f32 %v2793, %v2350
        %v2795 = vmax.f32 %v2794, %v2358
        %v2796 = vmax.f32 %v2795, %v2366
        %v2797 = vmax.f32 %v2796, %v2374
        %v2798 = vmax.f32 %v2797, %v2382
        %v2799 = vmax.f32 %v2798, %v2390
        %v2800 = vmax.f32 %v2799, %v2398
        %v2801 = vmax.f32 %v2800, %v2406
        %v2802 = vmax.f32 %v2801, %v2414
        %v2803 = vmax.f32 %v2802, %v2422
        %v2804 = vmax.f32 %v2803, %v2430
        %v2805 = vmax.f32 %v2804, %v2438
        %v2806 = vmax.f32 %v2805, %v2446
        %v2807 = vmax.f32 %v2806, %v2454
        %v2808 = vmax.f32 %v2807, %v2462
        %v2809 = vmax.f32 %v2808, %v2470
        %v2810 = vmax.f32 %v2809, %v2478
        %v2811 = vmax.f32 %v2810, %v2486
        %v2812 = vmax.f32 %v2811, %v2494
        %v2813 = vmax.f32 %v2812, %v2502
        %v2814 = vmax.f32 %v2813, %v2510
        %v2815 = vmax.f32 %v2814, %v2518
        %v2816 = vmax.f32 %v2815, %v2526
        %v2817 = vmax.f32 %v2816, %v2534
        %v2818 = vmax.f32 %v2817, %v2542
        %v2819 = vmax.f32 %v2818, %v2550
        %v2820 = vmax.f32 %v2819, %v2558
        %v2821 = vmax.f32 %v2820, %v2566
        %v2822 = vmax.f32 %v2821, %v2574
        %v2823 = vld [vmem:[%s294] sm:$0xff]
        %v2824 = vld [vmem:[%s294 + $0x8] sm:$0xff]
        %v2825 = vld [vmem:[%s294 + $0x10] sm:$0xff]
        %v2826 = vld [vmem:[%s294 + $0x18] sm:$0xff]
        %v2827 = vld [vmem:[%s294 + $0x20] sm:$0xff]
        %v2828 = vld [vmem:[%s294 + $0x28] sm:$0xff]
        %v2829 = vld [vmem:[%s294 + $0x30] sm:$0xff]
        %v2830 = vld [vmem:[%s294 + $0x38] sm:$0xff]
        %v2831 = vmax.f32 %v2823, %v2605
        %v2832 = vmax.f32 %v2824, %v2636
        %v2833 = vmax.f32 %v2825, %v2667
        %v2834 = vmax.f32 %v2826, %v2698
        %v2835 = vmax.f32 %v2827, %v2729
        %v2836 = vmax.f32 %v2828, %v2760
        %v2837 = vmax.f32 %v2829, %v2791
        %v2838 = vmax.f32 %v2830, %v2822
        %2839 = vst [vmem:[%s294] sm:$0xff] %v2831
        %2840 = vst [vmem:[%s294 + $0x8] sm:$0xff] %v2832
        %2841 = vst [vmem:[%s294 + $0x10] sm:$0xff] %v2833
        %2842 = vst [vmem:[%s294 + $0x18] sm:$0xff] %v2834
        %2843 = vst [vmem:[%s294 + $0x20] sm:$0xff] %v2835
        %2844 = vst [vmem:[%s294 + $0x28] sm:$0xff] %v2836
        %2845 = vst [vmem:[%s294 + $0x30] sm:$0xff] %v2837
        %2846 = vst [vmem:[%s294 + $0x38] sm:$0xff] %v2838
        %s2847 = sand.u32 %s195, 1
        %s2848 = scalar_lea.sflag [#allocation3], %s2847
        %s2849 = sand.u32 %s195, 1
        %s2850 = smul.addr %s2849, 64
        %s2851 = scalar_lea.vmem [#allocation2], %s2850
        // Predicated region
        $region53: #{tpu_custom_call.1} parent=47 // pred_check
          %p2852 = pneg %p205
        $region54: #{tpu_custom_call.1} parent=47 // pred_check_branch
          %2854 = sbr.rel (%p2852) target = $region56
        $region55: #{tpu_custom_call.1} parent=47 // pred_region
          %2856 = vsyncadd %s2848, 0
          %s2857 = smul.addr %s25, 8
          %s2858 = smul.addr %s2857, 8
          %s2859 = scalar_lea.hbm %s7, %s2858
          %s2861 = sshll.u32 %s2851, 4
          %s2862 = int_to_ptr.vmem [resolvable:$true] %s2861
          %s2863 = sshll.u32 %s2859, 4
          %s2864 = int_to_ptr.hbm [resolvable:$true] %s2863
          %2866 = dma.vmem_to_hbm [thread:$0]  %s2862, 1024, %s2864, %s2848
        $region56: #{tpu_custom_call.1} parent=47 // pred_fallthru
          _
      $region48: #{tpu_custom_call.1} parent=5 // pred_fallthru
        _
      %p2867 = scmp.le.s32.totalorder 2, %s16
      // Predicated region
      $region57: #{tpu_custom_call.1} parent=5 // pred_check
        %p2868 = pneg %p2867
      $region58: #{tpu_custom_call.1} parent=5 // pred_check_branch
        %2870 = sbr.rel (%p2868) target = $region60
      $region59: #{tpu_custom_call.1} parent=5 // pred_region
        %s2871 = ssub.s32 %s16, 2
        // Predicated region
        $region61: #{tpu_custom_call.1} parent=59 // pred_check
          %p2872 = pneg %p211
        $region62: #{tpu_custom_call.1} parent=59 // pred_check_branch
          %2874 = sbr.rel (%p2872) target = $region64
        $region63: #{tpu_custom_call.1} parent=59 // pred_region
          %s2875 = sand.u32 %s196, 1
          %s2876 = scalar_lea.sflag [#allocation3], %s2875
          %s2877 = sand.u32 %s196, 1
          %s2878 = smul.addr %s2877, 64
          %s2879 = scalar_lea.vmem [#allocation2], %s2878
          %2881 = dma.done %s2876, 1024
        $region64: #{tpu_custom_call.1} parent=59 // pred_fallthru
          _
      $region60: #{tpu_custom_call.1} parent=5 // pred_fallthru
        _
    $region6: #{tpu_custom_call.1} parent=1 // loop_footer
      %s20 = sadd.s32 1, %s16
    $region7: #{tpu_custom_call.1} parent=1 // loop_footer_branch
      %15 = sbr.rel target = $region3
    $region8: #{tpu_custom_call.1} parent=1 // loop_exit
      _
    %2882 = vsyncpa [#allocation3], 1
    %s2883 = scalar_lea.sflag [#allocation3], 1
    %2884 = vsyncpa %s2883, 1

</llo_original>
